<compile_context>
chip_gen: v6e
topology: v6e:2x2x1
jax: 0.10.0
libtpu: 0.0.40
codegen_flags: <defaults>
</compile_context>

<pallas_src>
import functools
import math

import jax
import jax.numpy as jnp
from jax.experimental import pallas as pl
from jax.experimental.pallas import tpu as pltpu


# -----------------------------------------------------------------------------
# Parameter slab: one (64, 128) array (bf16 by default), VMEM-resident.
# Weights are stored transposed (feature-major kernel computes W^T @ X):
#   rows  0:32, cols 0:8   -> [W1^T | b1]  (32, 8)   (b1 folded via x row 7 == 1)
#   rows 32:48, cols 0:32  -> W2^T         (16, 32)
#   rows 48:53, cols 0:16  -> W3^T         (5, 16)   rows 53:56 zero padding
#   rows 32:48, col  120   -> b2           (16,)
#   rows 48:53, col  120   -> b3           (5,)
# -----------------------------------------------------------------------------
SLAB_SHAPE = (64, 128)
_BIAS_COL = 120


def _round_up(n, m):
    return ((n + m - 1) // m) * m


def _predator_brain_kernel(xT_ref, slab_ref, oT_ref):
    # xT_ref : (cpb, 8, chunk)  compute dtype (bf16 default); row 7 is 1.0
    # slab_ref: (64, 128)       compute dtype, constant index_map (VMEM-resident)
    # oT_ref : (cpb, 5, chunk)  float32
    cpb = xT_ref.shape[0]
    cdtype = slab_ref.dtype

    # Weight reads hoisted out of the per-chunk loop (tiny, once per grid step).
    w1 = slab_ref[0:32, 0:8]                                      # (32, 8)
    w2 = slab_ref[32:48, 0:32]                                    # (16, 32)
    w3 = slab_ref[48:56, 0:16]                                    # (8, 16), rows 5:8 zero
    b2 = slab_ref[32:48, _BIAS_COL:_BIAS_COL + 1].astype(jnp.float32)   # (16, 1)
    b3 = slab_ref[48:56, _BIAS_COL:_BIAS_COL + 1].astype(jnp.float32)   # (8, 1)

    def chunk_body(c, carry):
        x = xT_ref[c]                                             # (8, chunk)
        # b1 is folded into the matmul via the constant 1.0 feature row.
        h1 = jnp.maximum(
            jnp.dot(w1, x, preferred_element_type=jnp.float32), 0.0)            # (32, chunk)
        h2 = jnp.maximum(
            jnp.dot(w2, h1.astype(cdtype), preferred_element_type=jnp.float32) + b2,
            0.0)                                                                 # (16, chunk)
        z = jnp.tanh(
            jnp.dot(w3, h2.astype(cdtype), preferred_element_type=jnp.float32) + b3)  # (8, chunk)
        # PyTorch: x[4] = sigmoid(x[4]) applied AFTER tanh -> sigmoid(tanh(.)) on row 4.
        row = jax.lax.broadcasted_iota(jnp.int32, z.shape, 0)
        z = jnp.where(row == 4, jax.nn.sigmoid(z), z)
        oT_ref[c] = z[0:5, :].astype(oT_ref.dtype)
        return carry

    # Inner sub-chunk loop keeps vreg pressure bounded while the grid-step tile
    # (cpb * chunk samples) stays large enough to amortize per-step overhead.
    jax.lax.fori_loop(0, cpb, chunk_body, 0, unroll=(cpb <= 8))


@functools.partial(jax.jit, static_argnames=("cpb",))
def _predator_brain_padded(xT3, slab, *, cpb):
    n_total, _, chunk = xT3.shape
    assert n_total % cpb == 0
    grid = (n_total // cpb,)
    return pl.pallas_call(
        _predator_brain_kernel,
        out_shape=jax.ShapeDtypeStruct((n_total, 5, chunk), jnp.float32),
        grid=grid,
        in_specs=[
            pl.BlockSpec((cpb, 8, chunk), lambda i: (i, 0, 0)),   # x tiles stream, lane-dense
            pl.BlockSpec(SLAB_SHAPE, lambda i: (0, 0)),           # weight slab, VMEM-resident
        ],
        out_specs=pl.BlockSpec((cpb, 5, chunk), lambda i: (i, 0, 0)),  # lane-dense output
        compiler_params=pltpu.CompilerParams(
            dimension_semantics=("parallel",),     # shards batch tiles over v7x's 2 TCs
            vmem_limit_bytes=32 * 1024 * 1024,     # explicit & tiny usage; safe on v5e/v6e/v7x
        ),
    )(xT3, slab)


def predator_brain_forward(x, slab, *, block_b=4096, chunk=512):
    """x: (7,) or (B, 7). slab: packed weights (see pack_params). Returns (5,) or (B, 5) f32."""
    squeeze = (x.ndim == 1)
    xb = x.reshape(1, 7) if squeeze else x
    b = xb.shape[0]

    # Lane-chunk size: multiple of 128, clipped to the (rounded) batch.
    chunk = max(128, (min(chunk, _round_up(b, 128)) // 128) * 128)
    n_needed = (b + chunk - 1) // chunk
    cpb_max = max(block_b // chunk, 1)
    if n_needed <= 1:
        cpb, n_total = 1, 1
    else:
        # Keep >= 2 grid steps when the batch allows (v7x two-TensorCore sharding).
        cpb = max(1, min(cpb_max, n_needed // 2))
        n_total = _round_up(n_needed, cpb)
    b_pad = n_total * chunk

    cdtype = slab.dtype
    # Feature-major chunks: columns = samples (lanes), rows 0..6 = features,
    # row 7 = constant 1.0 (folds b1 into the first MXU pass).
    # TODO(synk): callers that can supply x already laid out as (n_chunks, 8, chunk)
    # in the slab dtype skip this transpose/pad pass (an extra HBM round trip).
    xb_p = jnp.zeros((b_pad, 8), cdtype)
    xb_p = xb_p.at[:, 7].set(jnp.asarray(1.0, cdtype))
    xb_p = xb_p.at[:b, 0:7].set(xb.astype(cdtype))
    xT3 = xb_p.reshape(n_total, chunk, 8).transpose(0, 2, 1)      # (n_chunks, 8, chunk)

    o3 = _predator_brain_padded(xT3, slab, cpb=cpb)               # (n_chunks, 5, chunk) f32
    out = o3.transpose(0, 2, 1).reshape(b_pad, 5)[:b]
    return out[0] if squeeze else out


def init_params(key):
    """Deterministic init with the same shapes/init scheme as the PyTorch module.

    PyTorch nn.Linear stores weight as (out, in); here W is (in, out) so the
    reference computes x @ W + b.
    """
    k1, k2, k3, k4, k5, k6 = jax.random.split(key, 6)

    def lin(kw, kb, fan_in, fan_out):
        bound = 1.0 / math.sqrt(fan_in)
        w = jax.random.uniform(kw, (fan_in, fan_out), jnp.float32, -bound, bound)
        bv = jax.random.uniform(kb, (fan_out,), jnp.float32, -bound, bound)
        return w, bv

    w1, b1 = lin(k1, k2, 7, 32)
    w2, b2 = lin(k3, k4, 32, 16)
    w3, b3 = lin(k5, k6, 16, 5)
    return (w1, b1, w2, b2, w3, b3)


def pack_params(params, dtype=jnp.bfloat16):
    """Pack (W1,b1,W2,b2,W3,b3) into the single (64, 128) feature-major slab.

    dtype=bf16 (default) -> bf16 MXU operands with f32 accumulation (fast path
    on v5e/v6e/v7x); pass jnp.float32 for exact f32 matmuls.
    """
    w1, b1, w2, b2, w3, b3 = params
    slab = jnp.zeros(SLAB_SHAPE, jnp.float32)
    slab = slab.at[0:32, 0:7].set(w1.T)
    slab = slab.at[0:32, 7].set(b1)            # b1 folded into W1^T (pairs with x row 7 == 1)
    slab = slab.at[32:48, 0:32].set(w2.T)
    slab = slab.at[48:53, 0:16].set(w3.T)      # rows 53:56 stay zero
    slab = slab.at[32:48, _BIAS_COL].set(b2)
    slab = slab.at[48:53, _BIAS_COL].set(b3)
    return slab.astype(dtype)


def _reference_forward(x, params):
    """Pure-f32 JAX reference of the PyTorch module (works for (7,) or (B, 7))."""
    w1, b1, w2, b2, w3, b3 = params
    xb = x.reshape(-1, 7)
    h1 = jnp.maximum(xb @ w1 + b1, 0.0)
    h2 = jnp.maximum(h1 @ w2 + b2, 0.0)
    z = jnp.tanh(h2 @ w3 + b3)
    z = z.at[:, 4].set(jax.nn.sigmoid(z[:, 4]))
    return z.reshape(5) if x.ndim == 1 else z


def _reference_forward_quantized(x, params, dtype):
    """Reference with matmul operands rounded to `dtype` (mirrors the kernel's
    bf16-operand / f32-accumulate MXU path)."""
    def q(a):
        return a.astype(dtype).astype(jnp.float32)

    w1, b1, w2, b2, w3, b3 = params
    xb = q(x.reshape(-1, 7))
    h1 = jnp.maximum(xb @ q(w1) + q(b1), 0.0)
    h2 = jnp.maximum(q(h1) @ q(w2) + q(b2), 0.0)
    z = jnp.tanh(q(h2) @ q(w3) + q(b3))
    z = z.at[:, 4].set(jax.nn.sigmoid(z[:, 4]))
    return z.reshape(5) if x.ndim == 1 else z


if __name__ == "__main__":
    key = jax.random.PRNGKey(0)
    kp, kx1, kx2, kx3 = jax.random.split(key, 4)

    params = init_params(kp)
    slab = pack_params(params, dtype=jnp.bfloat16)   # bf16 MXU operands (review item)

    # ---- Batched path: 4096 samples -> grid of 2 steps, 4 sub-chunks of 512 each ----
    xb = jax.random.normal(kx1, (4096, 7), dtype=jnp.float32)
    outb = jax.block_until_ready(predator_brain_forward(xb, slab))
    assert outb.shape == (4096, 5)
    ref_q = _reference_forward_quantized(xb, params, jnp.bfloat16)
    ref_f = _reference_forward(xb, params)
    assert jnp.allclose(outb, ref_q, atol=2e-3, rtol=2e-3), float(jnp.max(jnp.abs(outb - ref_q)))
    assert jnp.allclose(outb, ref_f, atol=1e-1), float(jnp.max(jnp.abs(outb - ref_f)))

    # ---- Ragged batch (exercises lane padding inside a chunk) ----
    xr = jax.random.normal(kx2, (300, 7), dtype=jnp.float32)
    outr = jax.block_until_ready(predator_brain_forward(xr, slab))
    refr_q = _reference_forward_quantized(xr, params, jnp.bfloat16)
    assert outr.shape == (300, 5)
    assert jnp.allclose(outr, refr_q, atol=2e-3, rtol=2e-3), float(jnp.max(jnp.abs(outr - refr_q)))

    # ---- Single-sample path (original module signature: x of shape (7,)) ----
    x1 = jax.random.normal(kx3, (7,), dtype=jnp.float32)
    out1 = jax.block_until_ready(predator_brain_forward(x1, slab))
    ref1_q = _reference_forward_quantized(x1, params, jnp.bfloat16)
    ref1_f = _reference_forward(x1, params)
    assert out1.shape == (5,)
    assert jnp.allclose(out1, ref1_q, atol=2e-3, rtol=2e-3), float(jnp.max(jnp.abs(out1 - ref1_q)))
    assert jnp.allclose(out1, ref1_f, atol=1e-1), float(jnp.max(jnp.abs(out1 - ref1_f)))

    print("KERNEL_OK")
</pallas_src>

<mosaic_0001>
module attributes {stable_mosaic.version = 11 : i64} {
  func.func @_predator_brain_kernel(%arg0: i32, %arg1: memref<4x8x512xbf16, #tpu.memory_space<vmem>>, %arg2: memref<64x128xbf16, #tpu.memory_space<vmem>>, %arg3: memref<4x5x512xf32, #tpu.memory_space<vmem>>) attributes {dimension_semantics = [#tpu.dimension_semantics<parallel>], iteration_bounds = array<i64: 2>, scalar_prefetch = 0 : i64, scratch_operands = 0 : i64, tpu.core_type = #tpu.core_type<tc>, window_params = [{transform_indices = @transform_0, window_bounds = array<i64: 4, 8, 512>}, {pipeline_mode = #tpu.pipeline_mode<synchronous>, transform_indices = @transform_1, window_bounds = array<i64: 64, 128>}, {transform_indices = @transform_2, window_bounds = array<i64: 4, 5, 512>}]} {
    %c0 = arith.constant 0 : index
    %c0_0 = arith.constant 0 : index
    %0 = vector.load %arg2[%c0, %c0_0] : memref<64x128xbf16, #tpu.memory_space<vmem>>, vector<32x8xbf16>
    %c32 = arith.constant 32 : index
    %c0_1 = arith.constant 0 : index
    %1 = vector.load %arg2[%c32, %c0_1] : memref<64x128xbf16, #tpu.memory_space<vmem>>, vector<16x32xbf16>
    %c48 = arith.constant 48 : index
    %c0_2 = arith.constant 0 : index
    %2 = vector.load %arg2[%c48, %c0_2] : memref<64x128xbf16, #tpu.memory_space<vmem>>, vector<8x16xbf16>
    %c32_3 = arith.constant 32 : index
    %c120 = arith.constant 120 : index
    %3 = vector.load %arg2[%c32_3, %c120] : memref<64x128xbf16, #tpu.memory_space<vmem>>, vector<16x1xbf16>
    %4 = arith.extf %3 : vector<16x1xbf16> to vector<16x1xf32>
    %c48_4 = arith.constant 48 : index
    %c120_5 = arith.constant 120 : index
    %5 = vector.load %arg2[%c48_4, %c120_5] : memref<64x128xbf16, #tpu.memory_space<vmem>>, vector<8x1xbf16>
    %6 = arith.extf %5 : vector<8x1xbf16> to vector<8x1xf32>
    %c0_i32 = arith.constant 0 : i32
    %7 = arith.index_cast %c0_i32 : i32 to index
    %c0_6 = arith.constant 0 : index
    %c0_7 = arith.constant 0 : index
    %8 = vector.load %arg1[%7, %c0_6, %c0_7] : memref<4x8x512xbf16, #tpu.memory_space<vmem>>, vector<1x8x512xbf16>
    %9 = vector.shape_cast %8 : vector<1x8x512xbf16> to vector<8x512xbf16>
    %cst = arith.constant dense<0.000000e+00> : vector<32x512xf32>
    %10 = tpu.matmul %0, %9, %cst {dimension_numbers = #tpu.dot_dimension_numbers<[1], [0], [0], [1], [0, 0, 1, 1], [], []>} : vector<32x8xbf16>, vector<8x512xbf16>, vector<32x512xf32> -> vector<32x512xf32>
    %cst_8 = arith.constant 0.000000e+00 : f32
    %11 = vector.broadcast %cst_8 : f32 to vector<32x512xf32>
    %12 = arith.maximumf %10, %11 : vector<32x512xf32>
    %13 = arith.truncf %12 : vector<32x512xf32> to vector<32x512xbf16>
    %cst_9 = arith.constant dense<0.000000e+00> : vector<16x512xf32>
    %14 = tpu.matmul %1, %13, %cst_9 {dimension_numbers = #tpu.dot_dimension_numbers<[1], [0], [0], [1], [0, 0, 1, 1], [], []>} : vector<16x32xbf16>, vector<32x512xbf16>, vector<16x512xf32> -> vector<16x512xf32>
    %15 = vector.broadcast %4 : vector<16x1xf32> to vector<16x512xf32>
    %16 = arith.addf %14, %15 : vector<16x512xf32>
    %cst_10 = arith.constant 0.000000e+00 : f32
    %17 = vector.broadcast %cst_10 : f32 to vector<16x512xf32>
    %18 = arith.maximumf %16, %17 : vector<16x512xf32>
    %19 = arith.truncf %18 : vector<16x512xf32> to vector<16x512xbf16>
    %cst_11 = arith.constant dense<0.000000e+00> : vector<8x512xf32>
    %20 = tpu.matmul %2, %19, %cst_11 {dimension_numbers = #tpu.dot_dimension_numbers<[1], [0], [0], [1], [0, 0, 1, 1], [], []>} : vector<8x16xbf16>, vector<16x512xbf16>, vector<8x512xf32> -> vector<8x512xf32>
    %21 = vector.broadcast %6 : vector<8x1xf32> to vector<8x512xf32>
    %22 = arith.addf %20, %21 : vector<8x512xf32>
    %23 = math.tanh %22 : vector<8x512xf32>
    %24 = tpu.iota {dimensions = array<i32: 0>} : vector<8x512xi32>
    %c4_i32 = arith.constant 4 : i32
    %25 = vector.broadcast %c4_i32 : i32 to vector<8x512xi32>
    %26 = arith.cmpi eq, %24, %25 : vector<8x512xi32>
    %27 = arith.negf %23 : vector<8x512xf32>
    %28 = math.exp %27 : vector<8x512xf32>
    %cst_12 = arith.constant 1.000000e+00 : f32
    %29 = vector.broadcast %cst_12 : f32 to vector<8x512xf32>
    %30 = arith.addf %29, %28 : vector<8x512xf32>
    %31 = arith.divf %29, %30 : vector<8x512xf32>
    %32 = arith.select %26, %31, %23 : vector<8x512xi1>, vector<8x512xf32>
    %33 = vector.extract_strided_slice %32 {offsets = [0, 0], sizes = [5, 512], strides = [1, 1]} : vector<8x512xf32> to vector<5x512xf32>
    %34 = arith.index_cast %c0_i32 : i32 to index
    %c0_13 = arith.constant 0 : index
    %c0_14 = arith.constant 0 : index
    %35 = vector.load %arg3[%34, %c0_13, %c0_14] : memref<4x5x512xf32, #tpu.memory_space<vmem>>, vector<1x5x512xf32>
    %36 = vector.shape_cast %35 : vector<1x5x512xf32> to vector<5x512xf32>
    %37 = vector.shape_cast %33 : vector<5x512xf32> to vector<1x5x512xf32>
    tpu.vector_store %arg3[%34, %c0_13, %c0_14], %37 {strides = array<i32>} : memref<4x5x512xf32, #tpu.memory_space<vmem>>, vector<1x5x512xf32>,
    %c1_i32 = arith.constant 1 : i32
    %38 = arith.index_cast %c1_i32 : i32 to index
    %c0_15 = arith.constant 0 : index
    %c0_16 = arith.constant 0 : index
    %39 = vector.load %arg1[%38, %c0_15, %c0_16] : memref<4x8x512xbf16, #tpu.memory_space<vmem>>, vector<1x8x512xbf16>
    %40 = vector.shape_cast %39 : vector<1x8x512xbf16> to vector<8x512xbf16>
    %cst_17 = arith.constant dense<0.000000e+00> : vector<32x512xf32>
    %41 = tpu.matmul %0, %40, %cst_17 {dimension_numbers = #tpu.dot_dimension_numbers<[1], [0], [0], [1], [0, 0, 1, 1], [], []>} : vector<32x8xbf16>, vector<8x512xbf16>, vector<32x512xf32> -> vector<32x512xf32>
    %cst_18 = arith.constant 0.000000e+00 : f32
    %42 = vector.broadcast %cst_18 : f32 to vector<32x512xf32>
    %43 = arith.maximumf %41, %42 : vector<32x512xf32>
    %44 = arith.truncf %43 : vector<32x512xf32> to vector<32x512xbf16>
    %cst_19 = arith.constant dense<0.000000e+00> : vector<16x512xf32>
    %45 = tpu.matmul %1, %44, %cst_19 {dimension_numbers = #tpu.dot_dimension_numbers<[1], [0], [0], [1], [0, 0, 1, 1], [], []>} : vector<16x32xbf16>, vector<32x512xbf16>, vector<16x512xf32> -> vector<16x512xf32>
    %46 = vector.broadcast %4 : vector<16x1xf32> to vector<16x512xf32>
    %47 = arith.addf %45, %46 : vector<16x512xf32>
    %cst_20 = arith.constant 0.000000e+00 : f32
    %48 = vector.broadcast %cst_20 : f32 to vector<16x512xf32>
    %49 = arith.maximumf %47, %48 : vector<16x512xf32>
    %50 = arith.truncf %49 : vector<16x512xf32> to vector<16x512xbf16>
    %cst_21 = arith.constant dense<0.000000e+00> : vector<8x512xf32>
    %51 = tpu.matmul %2, %50, %cst_21 {dimension_numbers = #tpu.dot_dimension_numbers<[1], [0], [0], [1], [0, 0, 1, 1], [], []>} : vector<8x16xbf16>, vector<16x512xbf16>, vector<8x512xf32> -> vector<8x512xf32>
    %52 = vector.broadcast %6 : vector<8x1xf32> to vector<8x512xf32>
    %53 = arith.addf %51, %52 : vector<8x512xf32>
    %54 = math.tanh %53 : vector<8x512xf32>
    %55 = tpu.iota {dimensions = array<i32: 0>} : vector<8x512xi32>
    %c4_i32_22 = arith.constant 4 : i32
    %56 = vector.broadcast %c4_i32_22 : i32 to vector<8x512xi32>
    %57 = arith.cmpi eq, %55, %56 : vector<8x512xi32>
    %58 = arith.negf %54 : vector<8x512xf32>
    %59 = math.exp %58 : vector<8x512xf32>
    %cst_23 = arith.constant 1.000000e+00 : f32
    %60 = vector.broadcast %cst_23 : f32 to vector<8x512xf32>
    %61 = arith.addf %60, %59 : vector<8x512xf32>
    %62 = arith.divf %60, %61 : vector<8x512xf32>
    %63 = arith.select %57, %62, %54 : vector<8x512xi1>, vector<8x512xf32>
    %64 = vector.extract_strided_slice %63 {offsets = [0, 0], sizes = [5, 512], strides = [1, 1]} : vector<8x512xf32> to vector<5x512xf32>
    %65 = arith.index_cast %c1_i32 : i32 to index
    %c0_24 = arith.constant 0 : index
    %c0_25 = arith.constant 0 : index
    %66 = vector.load %arg3[%65, %c0_24, %c0_25] : memref<4x5x512xf32, #tpu.memory_space<vmem>>, vector<1x5x512xf32>
    %67 = vector.shape_cast %66 : vector<1x5x512xf32> to vector<5x512xf32>
    %68 = vector.shape_cast %64 : vector<5x512xf32> to vector<1x5x512xf32>
    tpu.vector_store %arg3[%65, %c0_24, %c0_25], %68 {strides = array<i32>} : memref<4x5x512xf32, #tpu.memory_space<vmem>>, vector<1x5x512xf32>,
    %c2_i32 = arith.constant 2 : i32
    %69 = arith.index_cast %c2_i32 : i32 to index
    %c0_26 = arith.constant 0 : index
    %c0_27 = arith.constant 0 : index
    %70 = vector.load %arg1[%69, %c0_26, %c0_27] : memref<4x8x512xbf16, #tpu.memory_space<vmem>>, vector<1x8x512xbf16>
    %71 = vector.shape_cast %70 : vector<1x8x512xbf16> to vector<8x512xbf16>
    %cst_28 = arith.constant dense<0.000000e+00> : vector<32x512xf32>
    %72 = tpu.matmul %0, %71, %cst_28 {dimension_numbers = #tpu.dot_dimension_numbers<[1], [0], [0], [1], [0, 0, 1, 1], [], []>} : vector<32x8xbf16>, vector<8x512xbf16>, vector<32x512xf32> -> vector<32x512xf32>
    %cst_29 = arith.constant 0.000000e+00 : f32
    %73 = vector.broadcast %cst_29 : f32 to vector<32x512xf32>
    %74 = arith.maximumf %72, %73 : vector<32x512xf32>
    %75 = arith.truncf %74 : vector<32x512xf32> to vector<32x512xbf16>
    %cst_30 = arith.constant dense<0.000000e+00> : vector<16x512xf32>
    %76 = tpu.matmul %1, %75, %cst_30 {dimension_numbers = #tpu.dot_dimension_numbers<[1], [0], [0], [1], [0, 0, 1, 1], [], []>} : vector<16x32xbf16>, vector<32x512xbf16>, vector<16x512xf32> -> vector<16x512xf32>
    %77 = vector.broadcast %4 : vector<16x1xf32> to vector<16x512xf32>
    %78 = arith.addf %76, %77 : vector<16x512xf32>
    %cst_31 = arith.constant 0.000000e+00 : f32
    %79 = vector.broadcast %cst_31 : f32 to vector<16x512xf32>
    %80 = arith.maximumf %78, %79 : vector<16x512xf32>
    %81 = arith.truncf %80 : vector<16x512xf32> to vector<16x512xbf16>
    %cst_32 = arith.constant dense<0.000000e+00> : vector<8x512xf32>
    %82 = tpu.matmul %2, %81, %cst_32 {dimension_numbers = #tpu.dot_dimension_numbers<[1], [0], [0], [1], [0, 0, 1, 1], [], []>} : vector<8x16xbf16>, vector<16x512xbf16>, vector<8x512xf32> -> vector<8x512xf32>
    %83 = vector.broadcast %6 : vector<8x1xf32> to vector<8x512xf32>
    %84 = arith.addf %82, %83 : vector<8x512xf32>
    %85 = math.tanh %84 : vector<8x512xf32>
    %86 = tpu.iota {dimensions = array<i32: 0>} : vector<8x512xi32>
    %c4_i32_33 = arith.constant 4 : i32
    %87 = vector.broadcast %c4_i32_33 : i32 to vector<8x512xi32>
    %88 = arith.cmpi eq, %86, %87 : vector<8x512xi32>
    %89 = arith.negf %85 : vector<8x512xf32>
    %90 = math.exp %89 : vector<8x512xf32>
    %cst_34 = arith.constant 1.000000e+00 : f32
    %91 = vector.broadcast %cst_34 : f32 to vector<8x512xf32>
    %92 = arith.addf %91, %90 : vector<8x512xf32>
    %93 = arith.divf %91, %92 : vector<8x512xf32>
    %94 = arith.select %88, %93, %85 : vector<8x512xi1>, vector<8x512xf32>
    %95 = vector.extract_strided_slice %94 {offsets = [0, 0], sizes = [5, 512], strides = [1, 1]} : vector<8x512xf32> to vector<5x512xf32>
    %96 = arith.index_cast %c2_i32 : i32 to index
    %c0_35 = arith.constant 0 : index
    %c0_36 = arith.constant 0 : index
    %97 = vector.load %arg3[%96, %c0_35, %c0_36] : memref<4x5x512xf32, #tpu.memory_space<vmem>>, vector<1x5x512xf32>
    %98 = vector.shape_cast %97 : vector<1x5x512xf32> to vector<5x512xf32>
    %99 = vector.shape_cast %95 : vector<5x512xf32> to vector<1x5x512xf32>
    tpu.vector_store %arg3[%96, %c0_35, %c0_36], %99 {strides = array<i32>} : memref<4x5x512xf32, #tpu.memory_space<vmem>>, vector<1x5x512xf32>,
    %c3_i32 = arith.constant 3 : i32
    %100 = arith.index_cast %c3_i32 : i32 to index
    %c0_37 = arith.constant 0 : index
    %c0_38 = arith.constant 0 : index
    %101 = vector.load %arg1[%100, %c0_37, %c0_38] : memref<4x8x512xbf16, #tpu.memory_space<vmem>>, vector<1x8x512xbf16>
    %102 = vector.shape_cast %101 : vector<1x8x512xbf16> to vector<8x512xbf16>
    %cst_39 = arith.constant dense<0.000000e+00> : vector<32x512xf32>
    %103 = tpu.matmul %0, %102, %cst_39 {dimension_numbers = #tpu.dot_dimension_numbers<[1], [0], [0], [1], [0, 0, 1, 1], [], []>} : vector<32x8xbf16>, vector<8x512xbf16>, vector<32x512xf32> -> vector<32x512xf32>
    %cst_40 = arith.constant 0.000000e+00 : f32
    %104 = vector.broadcast %cst_40 : f32 to vector<32x512xf32>
    %105 = arith.maximumf %103, %104 : vector<32x512xf32>
    %106 = arith.truncf %105 : vector<32x512xf32> to vector<32x512xbf16>
    %cst_41 = arith.constant dense<0.000000e+00> : vector<16x512xf32>
    %107 = tpu.matmul %1, %106, %cst_41 {dimension_numbers = #tpu.dot_dimension_numbers<[1], [0], [0], [1], [0, 0, 1, 1], [], []>} : vector<16x32xbf16>, vector<32x512xbf16>, vector<16x512xf32> -> vector<16x512xf32>
    %108 = vector.broadcast %4 : vector<16x1xf32> to vector<16x512xf32>
    %109 = arith.addf %107, %108 : vector<16x512xf32>
    %cst_42 = arith.constant 0.000000e+00 : f32
    %110 = vector.broadcast %cst_42 : f32 to vector<16x512xf32>
    %111 = arith.maximumf %109, %110 : vector<16x512xf32>
    %112 = arith.truncf %111 : vector<16x512xf32> to vector<16x512xbf16>
    %cst_43 = arith.constant dense<0.000000e+00> : vector<8x512xf32>
    %113 = tpu.matmul %2, %112, %cst_43 {dimension_numbers = #tpu.dot_dimension_numbers<[1], [0], [0], [1], [0, 0, 1, 1], [], []>} : vector<8x16xbf16>, vector<16x512xbf16>, vector<8x512xf32> -> vector<8x512xf32>
    %114 = vector.broadcast %6 : vector<8x1xf32> to vector<8x512xf32>
    %115 = arith.addf %113, %114 : vector<8x512xf32>
    %116 = math.tanh %115 : vector<8x512xf32>
    %117 = tpu.iota {dimensions = array<i32: 0>} : vector<8x512xi32>
    %c4_i32_44 = arith.constant 4 : i32
    %118 = vector.broadcast %c4_i32_44 : i32 to vector<8x512xi32>
    %119 = arith.cmpi eq, %117, %118 : vector<8x512xi32>
    %120 = arith.negf %116 : vector<8x512xf32>
    %121 = math.exp %120 : vector<8x512xf32>
    %cst_45 = arith.constant 1.000000e+00 : f32
    %122 = vector.broadcast %cst_45 : f32 to vector<8x512xf32>
    %123 = arith.addf %122, %121 : vector<8x512xf32>
    %124 = arith.divf %122, %123 : vector<8x512xf32>
    %125 = arith.select %119, %124, %116 : vector<8x512xi1>, vector<8x512xf32>
    %126 = vector.extract_strided_slice %125 {offsets = [0, 0], sizes = [5, 512], strides = [1, 1]} : vector<8x512xf32> to vector<5x512xf32>
    %127 = arith.index_cast %c3_i32 : i32 to index
    %c0_46 = arith.constant 0 : index
    %c0_47 = arith.constant 0 : index
    %128 = vector.load %arg3[%127, %c0_46, %c0_47] : memref<4x5x512xf32, #tpu.memory_space<vmem>>, vector<1x5x512xf32>
    %129 = vector.shape_cast %128 : vector<1x5x512xf32> to vector<5x512xf32>
    %130 = vector.shape_cast %126 : vector<5x512xf32> to vector<1x5x512xf32>
    tpu.vector_store %arg3[%127, %c0_46, %c0_47], %130 {strides = array<i32>} : memref<4x5x512xf32, #tpu.memory_space<vmem>>, vector<1x5x512xf32>,
    %c4_i32_48 = arith.constant 4 : i32
    return
  }
  func.func @transform_0(%arg0: i32) -> (i32, i32, i32) {
    %c0_i32 = arith.constant 0 : i32
    %c0_i32_0 = arith.constant 0 : i32
    %c0_i32_1 = arith.constant 0 : i32
    return %arg0, %c0_i32, %c0_i32_0 : i32, i32, i32
  }
  func.func @transform_1(%arg0: i32) -> (i32, i32) {
    %c0_i32 = arith.constant 0 : i32
    %c0_i32_0 = arith.constant 0 : i32
    %c0_i32_1 = arith.constant 0 : i32
    return %c0_i32, %c0_i32_0 : i32, i32
  }
  func.func @transform_2(%arg0: i32) -> (i32, i32, i32) {
    %c0_i32 = arith.constant 0 : i32
    %c0_i32_0 = arith.constant 0 : i32
    %c0_i32_1 = arith.constant 0 : i32
    return %arg0, %c0_i32, %c0_i32_0 : i32, i32, i32
  }
}

</mosaic_0001>

<llo_original>
// kernel: _predator_brain_padded.1
$region0: #{_predator_brain_padded.1}
  #allocation0 [shape = 'u32[]', space=smem, size = 0x4, offset = 0x4, fixed_abs, tag = 'smem constant byte address 0x4 - core index']
  #allocation1 [shape = 'u32[144,128]{1,0:T(1,128)}', space=vmem, size = 0x12000, scoped, tag = 'internal scratch']
  %s0 = inlined_call_operand.hbm [shape: bf16[8,8,512], index: 0, kind: input, shape index: {}]
  %s1 = inlined_call_operand.hbm [shape: bf16[64,128], index: 1, kind: input, shape index: {}]
  %s2 = inlined_call_operand.vmem [shape: f32[8,5,512], index: 2, kind: output, shape index: {}]
  %s3 = sld [smem:[#allocation0]]
  $region49: #{_predator_brain_padded.1} parent=0
    _
  %s5 = ssub.s32 1, %s3
  %s6 = scalar_select 0, %s5, %s3
  $region1: #{_predator_brain_padded.1} parent=0
    #allocation2 [shape = 'u8[65536]{0}', space=vmem, size = 0x10000, scoped, tag = 'input window, operand 0']
    #allocation3 [shape = 's32[2]{0}', space=sflag, size = 0x8, scoped, tag = 'scoped memory for _predator_brain_padded.1']
    #allocation4 [shape = 'u8[16384]{0}', space=vmem, size = 0x4000, scoped, tag = 'input window, operand 1, single buffered']
    #allocation5 [shape = 's32[1]{0}', space=sflag, size = 0x4, scoped, tag = 'scoped memory for _predator_brain_padded.1']
    %7 = vsyncpa [#allocation3], 0
    %s8 = scalar_lea.sflag [#allocation3], 1
    %9 = vsyncpa %s8, 0
    %10 = vsyncpa [#allocation5], 0
    loop: start=0, step=1, limit=4
    $region2: #{_predator_brain_padded.1} parent=1 // loop_pre_header
      _
    $region3: #{_predator_brain_padded.1} parent=1 // loop_header
      %s12 = sphi 0, %s16
      %p13 = scmp.ge.s32.totalorder %s12, 4
      %s22 = sphi 0, %s24
      %s25 = sphi 0, %s22
      %s26 = sphi 0, %s25
      %s42 = sphi 0, %s26
      %s46 = sphi 0, %s46
      %s48 = sphi 0, %s46
      %s49 = sphi 0, %s48
      %s63 = sphi 0, %s49
      %s69 = sphi 0, %s71
      %s72 = sphi 0, %s69
      %s73 = sphi 0, %s72
      %s89 = sphi 0, %s73
    $region4: #{_predator_brain_padded.1} parent=1 // loop_header_branch
      %15 = sbr.rel (%p13) target = $region8
    $region5: #{_predator_brain_padded.1} parent=1 // loop_body
      %s17 = ssub.s32 %s12, 1
      %s18 = ssub.s32 %s12, 2
      %s19 = sadd.s32 %s12, 1
      %s20 = ssub.s32 %s12, %s19
      %p21 = scmp.eq.s32.totalorder %s20, 0
      %s23 = sadd.s32 %s22, 1
      %s24 = scalar_select %p21, %s22, %s23
      %p27 = pneg %p21
      %p28 = scmp.eq.s32.totalorder %s12, 1
      %p29 = por %p27, %p28
      %p30 = scmp.ne.s32.totalorder %s22, %s25
      %p31 = scmp.eq.s32.totalorder %s12, 0
      %p32 = por %p30, %p31
      %p33 = scmp.ne.s32.totalorder %s22, %s25
      %p34 = scmp.eq.s32.totalorder %s17, 1
      %p35 = por %p33, %p34
      %p36 = scmp.ne.s32.totalorder %s25, %s26
      %p37 = scmp.eq.s32.totalorder %s17, 0
      %p38 = por %p36, %p37
      %p39 = scmp.ne.s32.totalorder %s25, %s26
      %p40 = scmp.eq.s32.totalorder %s18, 1
      %p41 = por %p39, %p40
      %p43 = scmp.ne.s32.totalorder %s26, %s42
      %p44 = scmp.eq.s32.totalorder %s18, 0
      %p45 = por %p43, %p44
      %s47 = sadd.s32 %s46, 1
      %p50 = scmp.eq.s32.totalorder %s12, 1
      %p51 = scmp.ne.s32.totalorder %s46, %s48
      %p52 = scmp.eq.s32.totalorder %s12, 0
      %p53 = por %p51, %p52
      %p54 = scmp.ne.s32.totalorder %s46, %s48
      %p55 = scmp.eq.s32.totalorder %s17, 1
      %p56 = por %p54, %p55
      %p57 = scmp.ne.s32.totalorder %s48, %s49
      %p58 = scmp.eq.s32.totalorder %s17, 0
      %p59 = por %p57, %p58
      %p60 = scmp.ne.s32.totalorder %s48, %s49
      %p61 = scmp.eq.s32.totalorder %s18, 1
      %p62 = por %p60, %p61
      %p64 = scmp.ne.s32.totalorder %s49, %s63
      %p65 = scmp.eq.s32.totalorder %s18, 0
      %p66 = por %p64, %p65
      %s67 = ssub.s32 %s12, %s19
      %p68 = scmp.eq.s32.totalorder %s67, 0
      %s70 = sadd.s32 %s69, 1
      %s71 = scalar_select %p68, %s69, %s70
      %p74 = pneg %p68
      %p75 = scmp.eq.s32.totalorder %s12, 1
      %p76 = por %p74, %p75
      %p77 = scmp.ne.s32.totalorder %s69, %s72
      %p78 = scmp.eq.s32.totalorder %s12, 0
      %p79 = por %p77, %p78
      %p80 = scmp.ne.s32.totalorder %s69, %s72
      %p81 = scmp.eq.s32.totalorder %s17, 1
      %p82 = por %p80, %p81
      %p83 = scmp.ne.s32.totalorder %s72, %s73
      %p84 = scmp.eq.s32.totalorder %s17, 0
      %p85 = por %p83, %p84
      %p86 = scmp.ne.s32.totalorder %s72, %s73
      %p87 = scmp.eq.s32.totalorder %s18, 1
      %p88 = por %p86, %p87
      %p90 = scmp.ne.s32.totalorder %s73, %s89
      %p91 = scmp.eq.s32.totalorder %s18, 0
      %p92 = por %p90, %p91
      %p93 = scmp.le.s32.totalorder 1, %s12
      %p94 = scmp.lt.s32.totalorder %s12, 3
      %p95 = pnand %p93, %p94
      %p96 = pneg %p95
      // Predicated region
      $region9: #{_predator_brain_padded.1} parent=5 // pred_check
        _
      $region10: #{_predator_brain_padded.1} parent=5 // pred_check_branch
        %98 = sbr.rel (%p95) target = $region12
      $region11: #{_predator_brain_padded.1} parent=5 // pred_region
        %s99 = ssub.s32 %s12, 1
        // Predicated region
        $region13: #{_predator_brain_padded.1} parent=11 // pred_check
          %p100 = pneg %p59
        $region14: #{_predator_brain_padded.1} parent=11 // pred_check_branch
          %102 = sbr.rel (%p100) target = $region16
        $region15: #{_predator_brain_padded.1} parent=11 // pred_region
          %s104 = ssub.s32 512, 512
          %105 = vsyncadd [#allocation5], %s104
          %s106 = sshll.u32 [#allocation4], 4
          %s107 = int_to_ptr.vmem [resolvable:$true] %s106
          %112 = dma.hbm_to_vmem [thread:$0]  %s1, 512, %s107, [#allocation5], 64, 64, 4
        $region16: #{_predator_brain_padded.1} parent=11 // pred_fallthru
          _
      $region12: #{_predator_brain_padded.1} parent=5 // pred_fallthru
        _
      %p113 = scmp.lt.s32.totalorder %s12, 2
      // Predicated region
      $region17: #{_predator_brain_padded.1} parent=5 // pred_check
        %p114 = pneg %p113
      $region18: #{_predator_brain_padded.1} parent=5 // pred_check_branch
        %116 = sbr.rel (%p114) target = $region20
      $region19: #{_predator_brain_padded.1} parent=5 // pred_region
        // Predicated region
        $region21: #{_predator_brain_padded.1} parent=19 // pred_check
          %p117 = pneg %p32
        $region22: #{_predator_brain_padded.1} parent=19 // pred_check_branch
          %119 = sbr.rel (%p117) target = $region24
        $region23: #{_predator_brain_padded.1} parent=19 // pred_region
          %s120 = sand.u32 %s22, 1
          %s121 = scalar_lea.sflag [#allocation3], %s120
          %s122 = sand.u32 %s22, 1
          %s123 = smul.addr %s122, 64
          %s124 = scalar_lea.vmem [#allocation2], %s123
          %s125 = smul.u32 4, %s12
          %s127 = ssub.s32 1024, 1024
          %128 = vsyncadd %s121, %s127
          %s129 = smul.addr %s125, 4
          %s130 = smul.addr %s129, 64
          %s131 = scalar_lea.hbm %s0, %s130
          %s132 = sshll.u32 %s124, 4
          %s133 = int_to_ptr.vmem [resolvable:$true] %s132
          %138 = dma.hbm_to_vmem [thread:$0]  %s131, 1024, %s133, %s121, 256, 256, 16
        $region24: #{_predator_brain_padded.1} parent=19 // pred_fallthru
          _
      $region20: #{_predator_brain_padded.1} parent=5 // pred_fallthru
        _
      %p139 = scmp.le.s32.totalorder 1, %s12
      %p140 = scmp.lt.s32.totalorder %s12, 3
      %p141 = pnand %p139, %p140
      %p142 = pneg %p141
      // Predicated region
      $region25: #{_predator_brain_padded.1} parent=5 // pred_check
        _
      $region26: #{_predator_brain_padded.1} parent=5 // pred_check_branch
        %144 = sbr.rel (%p141) target = $region28
      $region27: #{_predator_brain_padded.1} parent=5 // pred_region
        %s145 = ssub.s32 %s12, 1
        %s146 = sand.u32 %s25, 1
        %s147 = scalar_lea.sflag [#allocation3], %s146
        %s148 = sand.u32 %s25, 1
        %s149 = smul.addr %s148, 64
        %s150 = scalar_lea.vmem [#allocation2], %s149
        // Predicated region
        $region29: #{_predator_brain_padded.1} parent=27 // pred_check
          %p151 = pneg %p38
        $region30: #{_predator_brain_padded.1} parent=27 // pred_check_branch
          %153 = sbr.rel (%p151) target = $region32
        $region31: #{_predator_brain_padded.1} parent=27 // pred_region
          %154 = dma.done %s147, 1024
        $region32: #{_predator_brain_padded.1} parent=27 // pred_fallthru
          _
        // Predicated region
        $region33: #{_predator_brain_padded.1} parent=27 // pred_check
          %p155 = pneg %p59
        $region34: #{_predator_brain_padded.1} parent=27 // pred_check_branch
          %157 = sbr.rel (%p155) target = $region36
        $region35: #{_predator_brain_padded.1} parent=27 // pred_region
          %158 = dma.done [#allocation5], 512
        $region36: #{_predator_brain_padded.1} parent=27 // pred_fallthru
          _
        %s159 = sand.u32 %s25, 1
        %s160 = scalar_lea.sflag [#allocation3], %s159
        %s161 = sand.u32 %s25, 1
        %s162 = smul.addr %s161, 64
        %s163 = scalar_lea.vmem [#allocation2], %s162
        %p164 = pneg %p38
        %p165 = pneg %p35
        %p166 = pneg %p59
        %p167 = pneg %p56
        %p168 = pneg %p85
        %p169 = pneg %p82
        %s170 = smul.u32 4, %s17
        %p171 = scmp.lt.s32.totalorder %s170, 7
        %s172 = scalar_select %p171, %s170, 7
        %s173 = smul.addr %s172, 4
        %s174 = smul.addr %s173, 8
        %s175 = scalar_lea.vmem %s2, %s174
        %s176 = smul.u32 4, %s17
        %s177 = smul.u32 4, %s17
        %p178 = scmp.lt.s32.totalorder %s177, 7
        %s179 = scalar_select %p178, %s177, 7
        %s180 = smul.addr %s179, 4
        %s181 = smul.addr %s180, 8
        %s182 = scalar_lea.vmem %s2, %s181
        %s183 = smul.u32 4, %s17
        %v185 = vld [vmem:[#allocation4] sm:$0xf]
        %v186 = vld [vmem:[#allocation4 + $0x4] sm:$0xf]
        %v187 = vld [vmem:[#allocation4 + $0x8] sm:$0xf]
        %v188 = vld [vmem:[#allocation4 + $0xc] sm:$0xf]
        %v189 = vld [vmem:[#allocation4 + $0x10] sm:$0xf]
        %v190 = vld [vmem:[#allocation4 + $0x14] sm:$0xf]
        %v191 = vld [vmem:[#allocation4 + $0x18] sm:$0xf]
        %v192 = vunpack.c.l.bf16 %v189
        %v193 = vunpack.c.l.bf16 %v190
        %v194 = vunpack.c.l.bf16 %v191
        %v195 = vld [vmem:[%s150] sm:$0xff]
        %v196 = vld [vmem:[%s150 + $0x8] sm:$0xff]
        %v201 = vunpack.c.l.b16 %v185
        %v202 = vunpack.c.l.b16 %v186
        %v203 = vunpack.c.l.b16 %v187
        %v204 = vunpack.c.l.b16 %v188
        %v205 = vpack.c.b16 %v202, %v201
        %v206 = vpack.c.b16 %v204, %v203
        %v209 = vunpack.c.l.b16 %v195
        %v210 = vunpack.c.h.b16 %v195
        %v211 = vunpack.c.l.b16 %v196
        %v212 = vunpack.c.h.b16 %v196
        %v213 = vpack.c.b16 %v209, %v209
        %v214 = vpack.c.b16 %v210, %v210
        %v215 = vpack.c.b16 %v211, %v211
        %v216 = vpack.c.b16 %v212, %v212
        %vm217 = vcmask 64512
        %v219 = vsel %vm217, %v205, 0
        %v222 = vsel %vm217, %v206, 0
        %vm224 = vcmask 1043456
        %v226 = vsel %vm224, %v213, 0
        %v229 = vsel %vm224, %v214, 0
        %v232 = vsel %vm224, %v215, 0
        %v235 = vsel %vm224, %v216, 0
        %237 = vmatprep.subr.bf16.mxu0 0
        %238 = vmatpush1.bf16.msra.mxu0 0
        %239 = vmatprep.subr.bf16.mxu0 0
        %240 = vmatpush1.bf16.msra.mxu0 0
        %241 = vmatprep.subr.bf16.mxu0 0
        %242 = vmatpush1.bf16.msra.mxu0 0
        %243 = vmatprep.subr.bf16.mxu0 0
        %244 = vmatpush1.bf16.msra.mxu0 0
        %245 = vmatprep.subr.bf16.mxu0 0
        %246 = vmatpush1.bf16.msra.mxu0 0
        %247 = vmatprep.subr.bf16.mxu0 0
        %248 = vmatpush1.bf16.msra.mxu0 0
        %249 = vmatprep.subr.bf16.mxu0 0
        %250 = vmatpush1.bf16.msra.mxu0 0
        %251 = vmatprep.subr.bf16.mxu0 %v229
        %252 = vmatpush1.bf16.msra.mxu0 %v226
        %253 = vmatprep.subr.bf16.mxu0 0
        %254 = vmatpush2.bf16.msra.mxu0 0
        %255 = vmatprep.subr.bf16.mxu0 0
        %256 = vmatpush2.bf16.msra.mxu0 0
        %257 = vmatprep.subr.bf16.mxu0 0
        %258 = vmatpush2.bf16.msra.mxu0 0
        %259 = vmatprep.subr.bf16.mxu0 0
        %260 = vmatpush2.bf16.msra.mxu0 0
        %261 = vmatprep.subr.bf16.mxu0 0
        %262 = vmatpush2.bf16.msra.mxu0 0
        %263 = vmatprep.subr.bf16.mxu0 0
        %264 = vmatpush2.bf16.msra.mxu0 0
        %265 = vmatprep.subr.bf16.mxu0 0
        %266 = vmatpush2.bf16.msra.mxu0 0
        %267 = vmatprep.subr.bf16.mxu0 0
        %268 = vmatpush2.bf16.msra.mxu0 0
        %269 = vmatprep.mubr.bf16.mxu0 0
        %270 = vmatmul.mubr.bf16.gmra.mxu0 %v219
        %v271 = vpop.f32.mrf.mxu0
        %v272 = vadd.f32 0.0, %v271
        %v273 = vpop.f32.mrf.mxu0
        %v274 = vadd.f32 0.0, %v273
        %v275 = vpop.f32.mrf.mxu0
        %v276 = vadd.f32 0.0, %v275
        %v277 = vpop.f32.mrf.mxu0
        %v278 = vadd.f32 0.0, %v277
        %279 = vmatprep.mubr.bf16.mxu0 0
        %280 = vmatmul.mubr.bf16.gmra.mxu0 %v222
        %v281 = vpop.f32.mrf.mxu0
        %v282 = vadd.f32 0.0, %v281
        %v283 = vpop.f32.mrf.mxu0
        %v284 = vadd.f32 0.0, %v283
        %v285 = vpop.f32.mrf.mxu0
        %v286 = vadd.f32 0.0, %v285
        %v287 = vpop.f32.mrf.mxu0
        %v288 = vadd.f32 0.0, %v287
        %289 = vdwg.mxu0
        %290 = vmatprep.subr.bf16.mxu0 0
        %291 = vmatpush1.bf16.msra.mxu0 0
        %292 = vmatprep.subr.bf16.mxu0 0
        %293 = vmatpush1.bf16.msra.mxu0 0
        %294 = vmatprep.subr.bf16.mxu0 0
        %295 = vmatpush1.bf16.msra.mxu0 0
        %296 = vmatprep.subr.bf16.mxu0 0
        %297 = vmatpush1.bf16.msra.mxu0 0
        %298 = vmatprep.subr.bf16.mxu0 0
        %299 = vmatpush1.bf16.msra.mxu0 0
        %300 = vmatprep.subr.bf16.mxu0 0
        %301 = vmatpush1.bf16.msra.mxu0 0
        %302 = vmatprep.subr.bf16.mxu0 0
        %303 = vmatpush1.bf16.msra.mxu0 0
        %304 = vmatprep.subr.bf16.mxu0 %v235
        %305 = vmatpush1.bf16.msra.mxu0 %v232
        %306 = vmatprep.subr.bf16.mxu0 0
        %307 = vmatpush2.bf16.msra.mxu0 0
        %308 = vmatprep.subr.bf16.mxu0 0
        %309 = vmatpush2.bf16.msra.mxu0 0
        %310 = vmatprep.subr.bf16.mxu0 0
        %311 = vmatpush2.bf16.msra.mxu0 0
        %312 = vmatprep.subr.bf16.mxu0 0
        %313 = vmatpush2.bf16.msra.mxu0 0
        %314 = vmatprep.subr.bf16.mxu0 0
        %315 = vmatpush2.bf16.msra.mxu0 0
        %316 = vmatprep.subr.bf16.mxu0 0
        %317 = vmatpush2.bf16.msra.mxu0 0
        %318 = vmatprep.subr.bf16.mxu0 0
        %319 = vmatpush2.bf16.msra.mxu0 0
        %320 = vmatprep.subr.bf16.mxu0 0
        %321 = vmatpush2.bf16.msra.mxu0 0
        %322 = vmatprep.mubr.bf16.mxu0 0
        %323 = vmatmul.mubr.bf16.gmra.mxu0 %v219
        %v324 = vpop.f32.mrf.mxu0
        %v325 = vadd.f32 0.0, %v324
        %v326 = vpop.f32.mrf.mxu0
        %v327 = vadd.f32 0.0, %v326
        %v328 = vpop.f32.mrf.mxu0
        %v329 = vadd.f32 0.0, %v328
        %v330 = vpop.f32.mrf.mxu0
        %v331 = vadd.f32 0.0, %v330
        %332 = vmatprep.mubr.bf16.mxu0 0
        %333 = vmatmul.mubr.bf16.gmra.mxu0 %v222
        %v334 = vpop.f32.mrf.mxu0
        %v335 = vadd.f32 0.0, %v334
        %v336 = vpop.f32.mrf.mxu0
        %v337 = vadd.f32 0.0, %v336
        %v338 = vpop.f32.mrf.mxu0
        %v339 = vadd.f32 0.0, %v338
        %v340 = vpop.f32.mrf.mxu0
        %v341 = vadd.f32 0.0, %v340
        %342 = vdwg.mxu0
        %v343 = vmax.f32 %v272, 0.0
        %v344 = vmax.f32 %v274, 0.0
        %v345 = vmax.f32 %v325, 0.0
        %v346 = vmax.f32 %v327, 0.0
        %v347 = vmax.f32 %v276, 0.0
        %v348 = vmax.f32 %v278, 0.0
        %v349 = vmax.f32 %v329, 0.0
        %v350 = vmax.f32 %v331, 0.0
        %v351 = vmax.f32 %v282, 0.0
        %v352 = vmax.f32 %v284, 0.0
        %v353 = vmax.f32 %v335, 0.0
        %v354 = vmax.f32 %v337, 0.0
        %v355 = vmax.f32 %v286, 0.0
        %v356 = vmax.f32 %v288, 0.0
        %v357 = vmax.f32 %v339, 0.0
        %v358 = vmax.f32 %v341, 0.0
        %v359 = vpack.c.bf16 %v347, %v343
        %v360 = vpack.c.bf16 %v348, %v344
        %v361 = vpack.c.bf16 %v349, %v345
        %v362 = vpack.c.bf16 %v350, %v346
        %v363 = vpack.c.bf16 %v355, %v351
        %v364 = vpack.c.bf16 %v356, %v352
        %v365 = vpack.c.bf16 %v357, %v353
        %v366 = vpack.c.bf16 %v358, %v354
        %368 = vset.pattern.permute.xlu0 120
        %369 = vperm.xlu0 %368, %v192
        %v370 = vpop.permute.xlu0 %369
        %373 = vset.pattern.permute.xlu0 120
        %374 = vperm.xlu0 %373, %v193
        %v375 = vpop.permute.xlu0 %374
        %v379 = vunpack.c.l.b16 %v189
        %v380 = vunpack.c.l.b16 %v190
        %v381 = vpack.c.b16 %v380, %v379
        %vm382 = vcmask 261120
        %v384 = vsel %vm382, %v381, 0
        %386 = vmatprep.subr.bf16.mxu0 0
        %387 = vmatpush1.bf16.msra.mxu0 0
        %388 = vmatprep.subr.bf16.mxu0 0
        %389 = vmatpush1.bf16.msra.mxu0 0
        %390 = vmatprep.subr.bf16.mxu0 0
        %391 = vmatpush1.bf16.msra.mxu0 0
        %392 = vmatprep.subr.bf16.mxu0 0
        %393 = vmatpush1.bf16.msra.mxu0 0
        %394 = vmatprep.subr.bf16.mxu0 0
        %395 = vmatpush1.bf16.msra.mxu0 0
        %396 = vmatprep.subr.bf16.mxu0 0
        %397 = vmatpush1.bf16.msra.mxu0 0
        %398 = vmatprep.subr.bf16.mxu0 %v364
        %399 = vmatpush1.bf16.msra.mxu0 %v363
        %400 = vmatprep.subr.bf16.mxu0 %v360
        %401 = vmatpush1.bf16.msra.mxu0 %v359
        %402 = vmatprep.subr.bf16.mxu0 0
        %403 = vmatpush2.bf16.msra.mxu0 0
        %404 = vmatprep.subr.bf16.mxu0 0
        %405 = vmatpush2.bf16.msra.mxu0 0
        %406 = vmatprep.subr.bf16.mxu0 0
        %407 = vmatpush2.bf16.msra.mxu0 0
        %408 = vmatprep.subr.bf16.mxu0 0
        %409 = vmatpush2.bf16.msra.mxu0 0
        %410 = vmatprep.subr.bf16.mxu0 0
        %411 = vmatpush2.bf16.msra.mxu0 0
        %412 = vmatprep.subr.bf16.mxu0 0
        %413 = vmatpush2.bf16.msra.mxu0 0
        %414 = vmatprep.subr.bf16.mxu0 0
        %415 = vmatpush2.bf16.msra.mxu0 0
        %416 = vmatprep.subr.bf16.mxu0 0
        %417 = vmatpush2.bf16.msra.mxu0 0
        %418 = vmatprep.mubr.bf16.mxu0 0
        %419 = vmatmul.mubr.bf16.gmra.mxu0 %v384
        %v420 = vpop.f32.mrf.mxu0
        %v421 = vadd.f32 %v370, %v420
        %v422 = vpop.f32.mrf.mxu0
        %v423 = vadd.f32 %v370, %v422
        %v424 = vpop.f32.mrf.mxu0
        %v425 = vadd.f32 %v375, %v424
        %v426 = vpop.f32.mrf.mxu0
        %v427 = vadd.f32 %v375, %v426
        %428 = vdwg.mxu0
        %429 = vmatprep.subr.bf16.mxu0 0
        %430 = vmatpush1.bf16.msra.mxu0 0
        %431 = vmatprep.subr.bf16.mxu0 0
        %432 = vmatpush1.bf16.msra.mxu0 0
        %433 = vmatprep.subr.bf16.mxu0 0
        %434 = vmatpush1.bf16.msra.mxu0 0
        %435 = vmatprep.subr.bf16.mxu0 0
        %436 = vmatpush1.bf16.msra.mxu0 0
        %437 = vmatprep.subr.bf16.mxu0 0
        %438 = vmatpush1.bf16.msra.mxu0 0
        %439 = vmatprep.subr.bf16.mxu0 0
        %440 = vmatpush1.bf16.msra.mxu0 0
        %441 = vmatprep.subr.bf16.mxu0 %v366
        %442 = vmatpush1.bf16.msra.mxu0 %v365
        %443 = vmatprep.subr.bf16.mxu0 %v362
        %444 = vmatpush1.bf16.msra.mxu0 %v361
        %445 = vmatprep.subr.bf16.mxu0 0
        %446 = vmatpush2.bf16.msra.mxu0 0
        %447 = vmatprep.subr.bf16.mxu0 0
        %448 = vmatpush2.bf16.msra.mxu0 0
        %449 = vmatprep.subr.bf16.mxu0 0
        %450 = vmatpush2.bf16.msra.mxu0 0
        %451 = vmatprep.subr.bf16.mxu0 0
        %452 = vmatpush2.bf16.msra.mxu0 0
        %453 = vmatprep.subr.bf16.mxu0 0
        %454 = vmatpush2.bf16.msra.mxu0 0
        %455 = vmatprep.subr.bf16.mxu0 0
        %456 = vmatpush2.bf16.msra.mxu0 0
        %457 = vmatprep.subr.bf16.mxu0 0
        %458 = vmatpush2.bf16.msra.mxu0 0
        %459 = vmatprep.subr.bf16.mxu0 0
        %460 = vmatpush2.bf16.msra.mxu0 0
        %461 = vmatprep.mubr.bf16.mxu0 0
        %462 = vmatmul.mubr.bf16.gmra.mxu0 %v384
        %v463 = vpop.f32.mrf.mxu0
        %v464 = vadd.f32 %v370, %v463
        %v465 = vpop.f32.mrf.mxu0
        %v466 = vadd.f32 %v370, %v465
        %v467 = vpop.f32.mrf.mxu0
        %v468 = vadd.f32 %v375, %v467
        %v469 = vpop.f32.mrf.mxu0
        %v470 = vadd.f32 %v375, %v469
        %471 = vdwg.mxu0
        %v472 = vmax.f32 %v421, 0.0
        %v473 = vmax.f32 %v423, 0.0
        %v474 = vmax.f32 %v464, 0.0
        %v475 = vmax.f32 %v466, 0.0
        %v476 = vmax.f32 %v425, 0.0
        %v477 = vmax.f32 %v427, 0.0
        %v478 = vmax.f32 %v468, 0.0
        %v479 = vmax.f32 %v470, 0.0
        %v480 = vpack.c.bf16 %v476, %v472
        %v481 = vpack.c.bf16 %v477, %v473
        %v482 = vpack.c.bf16 %v478, %v474
        %v483 = vpack.c.bf16 %v479, %v475
        %485 = vset.pattern.permute.xlu0 120
        %486 = vperm.xlu0 %485, %v194
        %v487 = vpop.permute.xlu0 %486
        %vm489 = vcmask 130048
        %v491 = vsel %vm489, %v191, 0
        %493 = vmatprep.subr.bf16.mxu0 0
        %494 = vmatpush1.bf16.msra.mxu0 0
        %495 = vmatprep.subr.bf16.mxu0 0
        %496 = vmatpush1.bf16.msra.mxu0 0
        %497 = vmatprep.subr.bf16.mxu0 0
        %498 = vmatpush1.bf16.msra.mxu0 0
        %499 = vmatprep.subr.bf16.mxu0 0
        %500 = vmatpush1.bf16.msra.mxu0 0
        %501 = vmatprep.subr.bf16.mxu0 0
        %502 = vmatpush1.bf16.msra.mxu0 0
        %503 = vmatprep.subr.bf16.mxu0 0
        %504 = vmatpush1.bf16.msra.mxu0 0
        %505 = vmatprep.subr.bf16.mxu0 0
        %506 = vmatpush1.bf16.msra.mxu0 0
        %507 = vmatprep.subr.bf16.mxu0 %v481
        %508 = vmatpush1.bf16.msra.mxu0 %v480
        %509 = vmatprep.subr.bf16.mxu0 0
        %510 = vmatpush2.bf16.msra.mxu0 0
        %511 = vmatprep.subr.bf16.mxu0 0
        %512 = vmatpush2.bf16.msra.mxu0 0
        %513 = vmatprep.subr.bf16.mxu0 0
        %514 = vmatpush2.bf16.msra.mxu0 0
        %515 = vmatprep.subr.bf16.mxu0 0
        %516 = vmatpush2.bf16.msra.mxu0 0
        %517 = vmatprep.subr.bf16.mxu0 0
        %518 = vmatpush2.bf16.msra.mxu0 0
        %519 = vmatprep.subr.bf16.mxu0 0
        %520 = vmatpush2.bf16.msra.mxu0 0
        %521 = vmatprep.subr.bf16.mxu0 0
        %522 = vmatpush2.bf16.msra.mxu0 0
        %523 = vmatprep.subr.bf16.mxu0 0
        %524 = vmatpush2.bf16.msra.mxu0 0
        %525 = vmatprep.mubr.bf16.mxu0 0
        %526 = vmatmul.mubr.bf16.gmra.mxu0 %v491
        %v527 = vpop.f32.mrf.mxu0
        %v528 = vadd.f32 %v487, %v527
        %v529 = vpop.f32.mrf.mxu0
        %v530 = vadd.f32 %v487, %v529
        %v531 = vpop.f32.mrf.mxu0
        %v532 = vpop.f32.mrf.mxu0
        %533 = vdwg.mxu0
        %534 = vmatprep.subr.bf16.mxu0 0
        %535 = vmatpush1.bf16.msra.mxu0 0
        %536 = vmatprep.subr.bf16.mxu0 0
        %537 = vmatpush1.bf16.msra.mxu0 0
        %538 = vmatprep.subr.bf16.mxu0 0
        %539 = vmatpush1.bf16.msra.mxu0 0
        %540 = vmatprep.subr.bf16.mxu0 0
        %541 = vmatpush1.bf16.msra.mxu0 0
        %542 = vmatprep.subr.bf16.mxu0 0
        %543 = vmatpush1.bf16.msra.mxu0 0
        %544 = vmatprep.subr.bf16.mxu0 0
        %545 = vmatpush1.bf16.msra.mxu0 0
        %546 = vmatprep.subr.bf16.mxu0 0
        %547 = vmatpush1.bf16.msra.mxu0 0
        %548 = vmatprep.subr.bf16.mxu0 %v483
        %549 = vmatpush1.bf16.msra.mxu0 %v482
        %550 = vmatprep.subr.bf16.mxu0 0
        %551 = vmatpush2.bf16.msra.mxu0 0
        %552 = vmatprep.subr.bf16.mxu0 0
        %553 = vmatpush2.bf16.msra.mxu0 0
        %554 = vmatprep.subr.bf16.mxu0 0
        %555 = vmatpush2.bf16.msra.mxu0 0
        %556 = vmatprep.subr.bf16.mxu0 0
        %557 = vmatpush2.bf16.msra.mxu0 0
        %558 = vmatprep.subr.bf16.mxu0 0
        %559 = vmatpush2.bf16.msra.mxu0 0
        %560 = vmatprep.subr.bf16.mxu0 0
        %561 = vmatpush2.bf16.msra.mxu0 0
        %562 = vmatprep.subr.bf16.mxu0 0
        %563 = vmatpush2.bf16.msra.mxu0 0
        %564 = vmatprep.subr.bf16.mxu0 0
        %565 = vmatpush2.bf16.msra.mxu0 0
        %566 = vmatprep.mubr.bf16.mxu0 0
        %567 = vmatmul.mubr.bf16.gmra.mxu0 %v491
        %v568 = vpop.f32.mrf.mxu0
        %v569 = vadd.f32 %v487, %v568
        %v570 = vpop.f32.mrf.mxu0
        %v571 = vadd.f32 %v487, %v570
        %v572 = vpop.f32.mrf.mxu0
        %v573 = vpop.f32.mrf.mxu0
        %574 = vdwg.mxu0
        %v575 = vtanh.pop %v528
        %v576 = vtanh.pop %v530
        %v577 = vtanh.pop %v569
        %v578 = vtanh.pop %v571
        %v579 = vlaneseq
        %v580 = vshrl.u32 %v579, 7
        %vm581 = vcmp.eq.s32.totalorder %v580, 4
        %v582 = vxor.u32 %v575, 2147483648
        %v583 = vxor.u32 %v576, 2147483648
        %v584 = vxor.u32 %v577, 2147483648
        %v585 = vxor.u32 %v578, 2147483648
        %v586 = vmul.f32 %v582, 1.442695
        %v587 = vpow.pop %v586
        %v588 = vmul.f32 %v583, 1.442695
        %v589 = vpow.pop %v588
        %v590 = vmul.f32 %v584, 1.442695
        %v591 = vpow.pop %v590
        %v592 = vmul.f32 %v585, 1.442695
        %v593 = vpow.pop %v592
        %v594 = vadd.f32 %v587, 1.0
        %v595 = vadd.f32 %v589, 1.0
        %v596 = vadd.f32 %v591, 1.0
        %v597 = vadd.f32 %v593, 1.0
        %v598 = vrcp.pop %v594
        %v599 = vmul.f32 1.0, %v598
        %v600 = vrcp.pop %v595
        %v601 = vmul.f32 1.0, %v600
        %v602 = vrcp.pop %v596
        %v603 = vmul.f32 1.0, %v602
        %v604 = vrcp.pop %v597
        %v605 = vmul.f32 1.0, %v604
        %v606 = vsel %vm581, %v599, %v575
        %v607 = vsel %vm581, %v601, %v576
        %v608 = vsel %vm581, %v603, %v577
        %v609 = vsel %vm581, %v605, %v578
        %610 = vst [vmem:[%s182] sm:$0x1f] %v606
        %611 = vst [vmem:[%s182 + $0x8] sm:$0x1f] %v607
        %612 = vst [vmem:[%s182 + $0x10] sm:$0x1f] %v608
        %613 = vst [vmem:[%s182 + $0x18] sm:$0x1f] %v609
        %s614 = scalar_lea.vmem %s150, 16 [#allocation2]
        %v615 = vld [vmem:[%s614] sm:$0xff]
        %v616 = vld [vmem:[%s614 + $0x8] sm:$0xff]
        %v619 = vunpack.c.l.b16 %v615
        %v620 = vunpack.c.h.b16 %v615
        %v621 = vunpack.c.l.b16 %v616
        %v622 = vunpack.c.h.b16 %v616
        %v623 = vpack.c.b16 %v619, %v619
        %v624 = vpack.c.b16 %v620, %v620
        %v625 = vpack.c.b16 %v621, %v621
        %v626 = vpack.c.b16 %v622, %v622
        %v628 = vsel %vm224, %v623, 0
        %v631 = vsel %vm224, %v624, 0
        %v634 = vsel %vm224, %v625, 0
        %v637 = vsel %vm224, %v626, 0
        %639 = vmatprep.subr.bf16.mxu0 0
        %640 = vmatpush1.bf16.msra.mxu0 0
        %641 = vmatprep.subr.bf16.mxu0 0
        %642 = vmatpush1.bf16.msra.mxu0 0
        %643 = vmatprep.subr.bf16.mxu0 0
        %644 = vmatpush1.bf16.msra.mxu0 0
        %645 = vmatprep.subr.bf16.mxu0 0
        %646 = vmatpush1.bf16.msra.mxu0 0
        %647 = vmatprep.subr.bf16.mxu0 0
        %648 = vmatpush1.bf16.msra.mxu0 0
        %649 = vmatprep.subr.bf16.mxu0 0
        %650 = vmatpush1.bf16.msra.mxu0 0
        %651 = vmatprep.subr.bf16.mxu0 0
        %652 = vmatpush1.bf16.msra.mxu0 0
        %653 = vmatprep.subr.bf16.mxu0 %v631
        %654 = vmatpush1.bf16.msra.mxu0 %v628
        %655 = vmatprep.subr.bf16.mxu0 0
        %656 = vmatpush2.bf16.msra.mxu0 0
        %657 = vmatprep.subr.bf16.mxu0 0
        %658 = vmatpush2.bf16.msra.mxu0 0
        %659 = vmatprep.subr.bf16.mxu0 0
        %660 = vmatpush2.bf16.msra.mxu0 0
        %661 = vmatprep.subr.bf16.mxu0 0
        %662 = vmatpush2.bf16.msra.mxu0 0
        %663 = vmatprep.subr.bf16.mxu0 0
        %664 = vmatpush2.bf16.msra.mxu0 0
        %665 = vmatprep.subr.bf16.mxu0 0
        %666 = vmatpush2.bf16.msra.mxu0 0
        %667 = vmatprep.subr.bf16.mxu0 0
        %668 = vmatpush2.bf16.msra.mxu0 0
        %669 = vmatprep.subr.bf16.mxu0 0
        %670 = vmatpush2.bf16.msra.mxu0 0
        %671 = vmatprep.mubr.bf16.mxu0 0
        %672 = vmatmul.mubr.bf16.gmra.mxu0 %v219
        %v673 = vpop.f32.mrf.mxu0
        %v674 = vadd.f32 0.0, %v673
        %v675 = vpop.f32.mrf.mxu0
        %v676 = vadd.f32 0.0, %v675
        %v677 = vpop.f32.mrf.mxu0
        %v678 = vadd.f32 0.0, %v677
        %v679 = vpop.f32.mrf.mxu0
        %v680 = vadd.f32 0.0, %v679
        %681 = vmatprep.mubr.bf16.mxu0 0
        %682 = vmatmul.mubr.bf16.gmra.mxu0 %v222
        %v683 = vpop.f32.mrf.mxu0
        %v684 = vadd.f32 0.0, %v683
        %v685 = vpop.f32.mrf.mxu0
        %v686 = vadd.f32 0.0, %v685
        %v687 = vpop.f32.mrf.mxu0
        %v688 = vadd.f32 0.0, %v687
        %v689 = vpop.f32.mrf.mxu0
        %v690 = vadd.f32 0.0, %v689
        %691 = vdwg.mxu0
        %692 = vmatprep.subr.bf16.mxu0 0
        %693 = vmatpush1.bf16.msra.mxu0 0
        %694 = vmatprep.subr.bf16.mxu0 0
        %695 = vmatpush1.bf16.msra.mxu0 0
        %696 = vmatprep.subr.bf16.mxu0 0
        %697 = vmatpush1.bf16.msra.mxu0 0
        %698 = vmatprep.subr.bf16.mxu0 0
        %699 = vmatpush1.bf16.msra.mxu0 0
        %700 = vmatprep.subr.bf16.mxu0 0
        %701 = vmatpush1.bf16.msra.mxu0 0
        %702 = vmatprep.subr.bf16.mxu0 0
        %703 = vmatpush1.bf16.msra.mxu0 0
        %704 = vmatprep.subr.bf16.mxu0 0
        %705 = vmatpush1.bf16.msra.mxu0 0
        %706 = vmatprep.subr.bf16.mxu0 %v637
        %707 = vmatpush1.bf16.msra.mxu0 %v634
        %708 = vmatprep.subr.bf16.mxu0 0
        %709 = vmatpush2.bf16.msra.mxu0 0
        %710 = vmatprep.subr.bf16.mxu0 0
        %711 = vmatpush2.bf16.msra.mxu0 0
        %712 = vmatprep.subr.bf16.mxu0 0
        %713 = vmatpush2.bf16.msra.mxu0 0
        %714 = vmatprep.subr.bf16.mxu0 0
        %715 = vmatpush2.bf16.msra.mxu0 0
        %716 = vmatprep.subr.bf16.mxu0 0
        %717 = vmatpush2.bf16.msra.mxu0 0
        %718 = vmatprep.subr.bf16.mxu0 0
        %719 = vmatpush2.bf16.msra.mxu0 0
        %720 = vmatprep.subr.bf16.mxu0 0
        %721 = vmatpush2.bf16.msra.mxu0 0
        %722 = vmatprep.subr.bf16.mxu0 0
        %723 = vmatpush2.bf16.msra.mxu0 0
        %724 = vmatprep.mubr.bf16.mxu0 0
        %725 = vmatmul.mubr.bf16.gmra.mxu0 %v219
        %v726 = vpop.f32.mrf.mxu0
        %v727 = vadd.f32 0.0, %v726
        %v728 = vpop.f32.mrf.mxu0
        %v729 = vadd.f32 0.0, %v728
        %v730 = vpop.f32.mrf.mxu0
        %v731 = vadd.f32 0.0, %v730
        %v732 = vpop.f32.mrf.mxu0
        %v733 = vadd.f32 0.0, %v732
        %734 = vmatprep.mubr.bf16.mxu0 0
        %735 = vmatmul.mubr.bf16.gmra.mxu0 %v222
        %v736 = vpop.f32.mrf.mxu0
        %v737 = vadd.f32 0.0, %v736
        %v738 = vpop.f32.mrf.mxu0
        %v739 = vadd.f32 0.0, %v738
        %v740 = vpop.f32.mrf.mxu0
        %v741 = vadd.f32 0.0, %v740
        %v742 = vpop.f32.mrf.mxu0
        %v743 = vadd.f32 0.0, %v742
        %744 = vdwg.mxu0
        %v745 = vmax.f32 %v674, 0.0
        %v746 = vmax.f32 %v676, 0.0
        %v747 = vmax.f32 %v727, 0.0
        %v748 = vmax.f32 %v729, 0.0
        %v749 = vmax.f32 %v678, 0.0
        %v750 = vmax.f32 %v680, 0.0
        %v751 = vmax.f32 %v731, 0.0
        %v752 = vmax.f32 %v733, 0.0
        %v753 = vmax.f32 %v684, 0.0
        %v754 = vmax.f32 %v686, 0.0
        %v755 = vmax.f32 %v737, 0.0
        %v756 = vmax.f32 %v739, 0.0
        %v757 = vmax.f32 %v688, 0.0
        %v758 = vmax.f32 %v690, 0.0
        %v759 = vmax.f32 %v741, 0.0
        %v760 = vmax.f32 %v743, 0.0
        %v761 = vpack.c.bf16 %v749, %v745
        %v762 = vpack.c.bf16 %v750, %v746
        %v763 = vpack.c.bf16 %v751, %v747
        %v764 = vpack.c.bf16 %v752, %v748
        %v765 = vpack.c.bf16 %v757, %v753
        %v766 = vpack.c.bf16 %v758, %v754
        %v767 = vpack.c.bf16 %v759, %v755
        %v768 = vpack.c.bf16 %v760, %v756
        %769 = vmatprep.subr.bf16.mxu0 0
        %770 = vmatpush1.bf16.msra.mxu0 0
        %771 = vmatprep.subr.bf16.mxu0 0
        %772 = vmatpush1.bf16.msra.mxu0 0
        %773 = vmatprep.subr.bf16.mxu0 0
        %774 = vmatpush1.bf16.msra.mxu0 0
        %775 = vmatprep.subr.bf16.mxu0 0
        %776 = vmatpush1.bf16.msra.mxu0 0
        %777 = vmatprep.subr.bf16.mxu0 0
        %778 = vmatpush1.bf16.msra.mxu0 0
        %779 = vmatprep.subr.bf16.mxu0 0
        %780 = vmatpush1.bf16.msra.mxu0 0
        %781 = vmatprep.subr.bf16.mxu0 %v766
        %782 = vmatpush1.bf16.msra.mxu0 %v765
        %783 = vmatprep.subr.bf16.mxu0 %v762
        %784 = vmatpush1.bf16.msra.mxu0 %v761
        %785 = vmatprep.subr.bf16.mxu0 0
        %786 = vmatpush2.bf16.msra.mxu0 0
        %787 = vmatprep.subr.bf16.mxu0 0
        %788 = vmatpush2.bf16.msra.mxu0 0
        %789 = vmatprep.subr.bf16.mxu0 0
        %790 = vmatpush2.bf16.msra.mxu0 0
        %791 = vmatprep.subr.bf16.mxu0 0
        %792 = vmatpush2.bf16.msra.mxu0 0
        %793 = vmatprep.subr.bf16.mxu0 0
        %794 = vmatpush2.bf16.msra.mxu0 0
        %795 = vmatprep.subr.bf16.mxu0 0
        %796 = vmatpush2.bf16.msra.mxu0 0
        %797 = vmatprep.subr.bf16.mxu0 0
        %798 = vmatpush2.bf16.msra.mxu0 0
        %799 = vmatprep.subr.bf16.mxu0 0
        %800 = vmatpush2.bf16.msra.mxu0 0
        %801 = vmatprep.mubr.bf16.mxu0 0
        %802 = vmatmul.mubr.bf16.gmra.mxu0 %v384
        %v803 = vpop.f32.mrf.mxu0
        %v804 = vadd.f32 %v370, %v803
        %v805 = vpop.f32.mrf.mxu0
        %v806 = vadd.f32 %v370, %v805
        %v807 = vpop.f32.mrf.mxu0
        %v808 = vadd.f32 %v375, %v807
        %v809 = vpop.f32.mrf.mxu0
        %v810 = vadd.f32 %v375, %v809
        %811 = vdwg.mxu0
        %812 = vmatprep.subr.bf16.mxu0 0
        %813 = vmatpush1.bf16.msra.mxu0 0
        %814 = vmatprep.subr.bf16.mxu0 0
        %815 = vmatpush1.bf16.msra.mxu0 0
        %816 = vmatprep.subr.bf16.mxu0 0
        %817 = vmatpush1.bf16.msra.mxu0 0
        %818 = vmatprep.subr.bf16.mxu0 0
        %819 = vmatpush1.bf16.msra.mxu0 0
        %820 = vmatprep.subr.bf16.mxu0 0
        %821 = vmatpush1.bf16.msra.mxu0 0
        %822 = vmatprep.subr.bf16.mxu0 0
        %823 = vmatpush1.bf16.msra.mxu0 0
        %824 = vmatprep.subr.bf16.mxu0 %v768
        %825 = vmatpush1.bf16.msra.mxu0 %v767
        %826 = vmatprep.subr.bf16.mxu0 %v764
        %827 = vmatpush1.bf16.msra.mxu0 %v763
        %828 = vmatprep.subr.bf16.mxu0 0
        %829 = vmatpush2.bf16.msra.mxu0 0
        %830 = vmatprep.subr.bf16.mxu0 0
        %831 = vmatpush2.bf16.msra.mxu0 0
        %832 = vmatprep.subr.bf16.mxu0 0
        %833 = vmatpush2.bf16.msra.mxu0 0
        %834 = vmatprep.subr.bf16.mxu0 0
        %835 = vmatpush2.bf16.msra.mxu0 0
        %836 = vmatprep.subr.bf16.mxu0 0
        %837 = vmatpush2.bf16.msra.mxu0 0
        %838 = vmatprep.subr.bf16.mxu0 0
        %839 = vmatpush2.bf16.msra.mxu0 0
        %840 = vmatprep.subr.bf16.mxu0 0
        %841 = vmatpush2.bf16.msra.mxu0 0
        %842 = vmatprep.subr.bf16.mxu0 0
        %843 = vmatpush2.bf16.msra.mxu0 0
        %844 = vmatprep.mubr.bf16.mxu0 0
        %845 = vmatmul.mubr.bf16.gmra.mxu0 %v384
        %v846 = vpop.f32.mrf.mxu0
        %v847 = vadd.f32 %v370, %v846
        %v848 = vpop.f32.mrf.mxu0
        %v849 = vadd.f32 %v370, %v848
        %v850 = vpop.f32.mrf.mxu0
        %v851 = vadd.f32 %v375, %v850
        %v852 = vpop.f32.mrf.mxu0
        %v853 = vadd.f32 %v375, %v852
        %854 = vdwg.mxu0
        %v855 = vmax.f32 %v804, 0.0
        %v856 = vmax.f32 %v806, 0.0
        %v857 = vmax.f32 %v847, 0.0
        %v858 = vmax.f32 %v849, 0.0
        %v859 = vmax.f32 %v808, 0.0
        %v860 = vmax.f32 %v810, 0.0
        %v861 = vmax.f32 %v851, 0.0
        %v862 = vmax.f32 %v853, 0.0
        %v863 = vpack.c.bf16 %v859, %v855
        %v864 = vpack.c.bf16 %v860, %v856
        %v865 = vpack.c.bf16 %v861, %v857
        %v866 = vpack.c.bf16 %v862, %v858
        %867 = vmatprep.subr.bf16.mxu0 0
        %868 = vmatpush1.bf16.msra.mxu0 0
        %869 = vmatprep.subr.bf16.mxu0 0
        %870 = vmatpush1.bf16.msra.mxu0 0
        %871 = vmatprep.subr.bf16.mxu0 0
        %872 = vmatpush1.bf16.msra.mxu0 0
        %873 = vmatprep.subr.bf16.mxu0 0
        %874 = vmatpush1.bf16.msra.mxu0 0
        %875 = vmatprep.subr.bf16.mxu0 0
        %876 = vmatpush1.bf16.msra.mxu0 0
        %877 = vmatprep.subr.bf16.mxu0 0
        %878 = vmatpush1.bf16.msra.mxu0 0
        %879 = vmatprep.subr.bf16.mxu0 0
        %880 = vmatpush1.bf16.msra.mxu0 0
        %881 = vmatprep.subr.bf16.mxu0 %v864
        %882 = vmatpush1.bf16.msra.mxu0 %v863
        %883 = vmatprep.subr.bf16.mxu0 0
        %884 = vmatpush2.bf16.msra.mxu0 0
        %885 = vmatprep.subr.bf16.mxu0 0
        %886 = vmatpush2.bf16.msra.mxu0 0
        %887 = vmatprep.subr.bf16.mxu0 0
        %888 = vmatpush2.bf16.msra.mxu0 0
        %889 = vmatprep.subr.bf16.mxu0 0
        %890 = vmatpush2.bf16.msra.mxu0 0
        %891 = vmatprep.subr.bf16.mxu0 0
        %892 = vmatpush2.bf16.msra.mxu0 0
        %893 = vmatprep.subr.bf16.mxu0 0
        %894 = vmatpush2.bf16.msra.mxu0 0
        %895 = vmatprep.subr.bf16.mxu0 0
        %896 = vmatpush2.bf16.msra.mxu0 0
        %897 = vmatprep.subr.bf16.mxu0 0
        %898 = vmatpush2.bf16.msra.mxu0 0
        %899 = vmatprep.mubr.bf16.mxu0 0
        %900 = vmatmul.mubr.bf16.gmra.mxu0 %v491
        %v901 = vpop.f32.mrf.mxu0
        %v902 = vadd.f32 %v487, %v901
        %v903 = vpop.f32.mrf.mxu0
        %v904 = vadd.f32 %v487, %v903
        %v905 = vpop.f32.mrf.mxu0
        %v906 = vpop.f32.mrf.mxu0
        %907 = vdwg.mxu0
        %908 = vmatprep.subr.bf16.mxu0 0
        %909 = vmatpush1.bf16.msra.mxu0 0
        %910 = vmatprep.subr.bf16.mxu0 0
        %911 = vmatpush1.bf16.msra.mxu0 0
        %912 = vmatprep.subr.bf16.mxu0 0
        %913 = vmatpush1.bf16.msra.mxu0 0
        %914 = vmatprep.subr.bf16.mxu0 0
        %915 = vmatpush1.bf16.msra.mxu0 0
        %916 = vmatprep.subr.bf16.mxu0 0
        %917 = vmatpush1.bf16.msra.mxu0 0
        %918 = vmatprep.subr.bf16.mxu0 0
        %919 = vmatpush1.bf16.msra.mxu0 0
        %920 = vmatprep.subr.bf16.mxu0 0
        %921 = vmatpush1.bf16.msra.mxu0 0
        %922 = vmatprep.subr.bf16.mxu0 %v866
        %923 = vmatpush1.bf16.msra.mxu0 %v865
        %924 = vmatprep.subr.bf16.mxu0 0
        %925 = vmatpush2.bf16.msra.mxu0 0
        %926 = vmatprep.subr.bf16.mxu0 0
        %927 = vmatpush2.bf16.msra.mxu0 0
        %928 = vmatprep.subr.bf16.mxu0 0
        %929 = vmatpush2.bf16.msra.mxu0 0
        %930 = vmatprep.subr.bf16.mxu0 0
        %931 = vmatpush2.bf16.msra.mxu0 0
        %932 = vmatprep.subr.bf16.mxu0 0
        %933 = vmatpush2.bf16.msra.mxu0 0
        %934 = vmatprep.subr.bf16.mxu0 0
        %935 = vmatpush2.bf16.msra.mxu0 0
        %936 = vmatprep.subr.bf16.mxu0 0
        %937 = vmatpush2.bf16.msra.mxu0 0
        %938 = vmatprep.subr.bf16.mxu0 0
        %939 = vmatpush2.bf16.msra.mxu0 0
        %940 = vmatprep.mubr.bf16.mxu0 0
        %941 = vmatmul.mubr.bf16.gmra.mxu0 %v491
        %v942 = vpop.f32.mrf.mxu0
        %v943 = vadd.f32 %v487, %v942
        %v944 = vpop.f32.mrf.mxu0
        %v945 = vadd.f32 %v487, %v944
        %v946 = vpop.f32.mrf.mxu0
        %v947 = vpop.f32.mrf.mxu0
        %948 = vdwg.mxu0
        %v949 = vtanh.pop %v902
        %v950 = vtanh.pop %v904
        %v951 = vtanh.pop %v943
        %v952 = vtanh.pop %v945
        %v953 = vxor.u32 %v949, 2147483648
        %v954 = vxor.u32 %v950, 2147483648
        %v955 = vxor.u32 %v951, 2147483648
        %v956 = vxor.u32 %v952, 2147483648
        %v957 = vmul.f32 %v953, 1.442695
        %v958 = vpow.pop %v957
        %v959 = vmul.f32 %v954, 1.442695
        %v960 = vpow.pop %v959
        %v961 = vmul.f32 %v955, 1.442695
        %v962 = vpow.pop %v961
        %v963 = vmul.f32 %v956, 1.442695
        %v964 = vpow.pop %v963
        %v965 = vadd.f32 %v958, 1.0
        %v966 = vadd.f32 %v960, 1.0
        %v967 = vadd.f32 %v962, 1.0
        %v968 = vadd.f32 %v964, 1.0
        %v969 = vrcp.pop %v965
        %v970 = vmul.f32 1.0, %v969
        %v971 = vrcp.pop %v966
        %v972 = vmul.f32 1.0, %v971
        %v973 = vrcp.pop %v967
        %v974 = vmul.f32 1.0, %v973
        %v975 = vrcp.pop %v968
        %v976 = vmul.f32 1.0, %v975
        %v977 = vsel %vm581, %v970, %v949
        %v978 = vsel %vm581, %v972, %v950
        %v979 = vsel %vm581, %v974, %v951
        %v980 = vsel %vm581, %v976, %v952
        %s981 = scalar_lea.vmem %s182, 32
        %982 = vst [vmem:[%s981] sm:$0x1f] %v977
        %983 = vst [vmem:[%s981 + $0x8] sm:$0x1f] %v978
        %984 = vst [vmem:[%s981 + $0x10] sm:$0x1f] %v979
        %985 = vst [vmem:[%s981 + $0x18] sm:$0x1f] %v980
        %s986 = scalar_lea.vmem %s150, 32 [#allocation2]
        %v987 = vld [vmem:[%s986] sm:$0xff]
        %v988 = vld [vmem:[%s986 + $0x8] sm:$0xff]
        %v991 = vunpack.c.l.b16 %v987
        %v992 = vunpack.c.h.b16 %v987
        %v993 = vunpack.c.l.b16 %v988
        %v994 = vunpack.c.h.b16 %v988
        %v995 = vpack.c.b16 %v991, %v991
        %v996 = vpack.c.b16 %v992, %v992
        %v997 = vpack.c.b16 %v993, %v993
        %v998 = vpack.c.b16 %v994, %v994
        %v1000 = vsel %vm224, %v995, 0
        %v1003 = vsel %vm224, %v996, 0
        %v1006 = vsel %vm224, %v997, 0
        %v1009 = vsel %vm224, %v998, 0
        %1011 = vmatprep.subr.bf16.mxu0 0
        %1012 = vmatpush1.bf16.msra.mxu0 0
        %1013 = vmatprep.subr.bf16.mxu0 0
        %1014 = vmatpush1.bf16.msra.mxu0 0
        %1015 = vmatprep.subr.bf16.mxu0 0
        %1016 = vmatpush1.bf16.msra.mxu0 0
        %1017 = vmatprep.subr.bf16.mxu0 0
        %1018 = vmatpush1.bf16.msra.mxu0 0
        %1019 = vmatprep.subr.bf16.mxu0 0
        %1020 = vmatpush1.bf16.msra.mxu0 0
        %1021 = vmatprep.subr.bf16.mxu0 0
        %1022 = vmatpush1.bf16.msra.mxu0 0
        %1023 = vmatprep.subr.bf16.mxu0 0
        %1024 = vmatpush1.bf16.msra.mxu0 0
        %1025 = vmatprep.subr.bf16.mxu0 %v1003
        %1026 = vmatpush1.bf16.msra.mxu0 %v1000
        %1027 = vmatprep.subr.bf16.mxu0 0
        %1028 = vmatpush2.bf16.msra.mxu0 0
        %1029 = vmatprep.subr.bf16.mxu0 0
        %1030 = vmatpush2.bf16.msra.mxu0 0
        %1031 = vmatprep.subr.bf16.mxu0 0
        %1032 = vmatpush2.bf16.msra.mxu0 0
        %1033 = vmatprep.subr.bf16.mxu0 0
        %1034 = vmatpush2.bf16.msra.mxu0 0
        %1035 = vmatprep.subr.bf16.mxu0 0
        %1036 = vmatpush2.bf16.msra.mxu0 0
        %1037 = vmatprep.subr.bf16.mxu0 0
        %1038 = vmatpush2.bf16.msra.mxu0 0
        %1039 = vmatprep.subr.bf16.mxu0 0
        %1040 = vmatpush2.bf16.msra.mxu0 0
        %1041 = vmatprep.subr.bf16.mxu0 0
        %1042 = vmatpush2.bf16.msra.mxu0 0
        %1043 = vmatprep.mubr.bf16.mxu0 0
        %1044 = vmatmul.mubr.bf16.gmra.mxu0 %v219
        %v1045 = vpop.f32.mrf.mxu0
        %v1046 = vadd.f32 0.0, %v1045
        %v1047 = vpop.f32.mrf.mxu0
        %v1048 = vadd.f32 0.0, %v1047
        %v1049 = vpop.f32.mrf.mxu0
        %v1050 = vadd.f32 0.0, %v1049
        %v1051 = vpop.f32.mrf.mxu0
        %v1052 = vadd.f32 0.0, %v1051
        %1053 = vmatprep.mubr.bf16.mxu0 0
        %1054 = vmatmul.mubr.bf16.gmra.mxu0 %v222
        %v1055 = vpop.f32.mrf.mxu0
        %v1056 = vadd.f32 0.0, %v1055
        %v1057 = vpop.f32.mrf.mxu0
        %v1058 = vadd.f32 0.0, %v1057
        %v1059 = vpop.f32.mrf.mxu0
        %v1060 = vadd.f32 0.0, %v1059
        %v1061 = vpop.f32.mrf.mxu0
        %v1062 = vadd.f32 0.0, %v1061
        %1063 = vdwg.mxu0
        %1064 = vmatprep.subr.bf16.mxu0 0
        %1065 = vmatpush1.bf16.msra.mxu0 0
        %1066 = vmatprep.subr.bf16.mxu0 0
        %1067 = vmatpush1.bf16.msra.mxu0 0
        %1068 = vmatprep.subr.bf16.mxu0 0
        %1069 = vmatpush1.bf16.msra.mxu0 0
        %1070 = vmatprep.subr.bf16.mxu0 0
        %1071 = vmatpush1.bf16.msra.mxu0 0
        %1072 = vmatprep.subr.bf16.mxu0 0
        %1073 = vmatpush1.bf16.msra.mxu0 0
        %1074 = vmatprep.subr.bf16.mxu0 0
        %1075 = vmatpush1.bf16.msra.mxu0 0
        %1076 = vmatprep.subr.bf16.mxu0 0
        %1077 = vmatpush1.bf16.msra.mxu0 0
        %1078 = vmatprep.subr.bf16.mxu0 %v1009
        %1079 = vmatpush1.bf16.msra.mxu0 %v1006
        %1080 = vmatprep.subr.bf16.mxu0 0
        %1081 = vmatpush2.bf16.msra.mxu0 0
        %1082 = vmatprep.subr.bf16.mxu0 0
        %1083 = vmatpush2.bf16.msra.mxu0 0
        %1084 = vmatprep.subr.bf16.mxu0 0
        %1085 = vmatpush2.bf16.msra.mxu0 0
        %1086 = vmatprep.subr.bf16.mxu0 0
        %1087 = vmatpush2.bf16.msra.mxu0 0
        %1088 = vmatprep.subr.bf16.mxu0 0
        %1089 = vmatpush2.bf16.msra.mxu0 0
        %1090 = vmatprep.subr.bf16.mxu0 0
        %1091 = vmatpush2.bf16.msra.mxu0 0
        %1092 = vmatprep.subr.bf16.mxu0 0
        %1093 = vmatpush2.bf16.msra.mxu0 0
        %1094 = vmatprep.subr.bf16.mxu0 0
        %1095 = vmatpush2.bf16.msra.mxu0 0
        %1096 = vmatprep.mubr.bf16.mxu0 0
        %1097 = vmatmul.mubr.bf16.gmra.mxu0 %v219
        %v1098 = vpop.f32.mrf.mxu0
        %v1099 = vadd.f32 0.0, %v1098
        %v1100 = vpop.f32.mrf.mxu0
        %v1101 = vadd.f32 0.0, %v1100
        %v1102 = vpop.f32.mrf.mxu0
        %v1103 = vadd.f32 0.0, %v1102
        %v1104 = vpop.f32.mrf.mxu0
        %v1105 = vadd.f32 0.0, %v1104
        %1106 = vmatprep.mubr.bf16.mxu0 0
        %1107 = vmatmul.mubr.bf16.gmra.mxu0 %v222
        %v1108 = vpop.f32.mrf.mxu0
        %v1109 = vadd.f32 0.0, %v1108
        %v1110 = vpop.f32.mrf.mxu0
        %v1111 = vadd.f32 0.0, %v1110
        %v1112 = vpop.f32.mrf.mxu0
        %v1113 = vadd.f32 0.0, %v1112
        %v1114 = vpop.f32.mrf.mxu0
        %v1115 = vadd.f32 0.0, %v1114
        %1116 = vdwg.mxu0
        %v1117 = vmax.f32 %v1046, 0.0
        %v1118 = vmax.f32 %v1048, 0.0
        %v1119 = vmax.f32 %v1099, 0.0
        %v1120 = vmax.f32 %v1101, 0.0
        %v1121 = vmax.f32 %v1050, 0.0
        %v1122 = vmax.f32 %v1052, 0.0
        %v1123 = vmax.f32 %v1103, 0.0
        %v1124 = vmax.f32 %v1105, 0.0
        %v1125 = vmax.f32 %v1056, 0.0
        %v1126 = vmax.f32 %v1058, 0.0
        %v1127 = vmax.f32 %v1109, 0.0
        %v1128 = vmax.f32 %v1111, 0.0
        %v1129 = vmax.f32 %v1060, 0.0
        %v1130 = vmax.f32 %v1062, 0.0
        %v1131 = vmax.f32 %v1113, 0.0
        %v1132 = vmax.f32 %v1115, 0.0
        %v1133 = vpack.c.bf16 %v1121, %v1117
        %v1134 = vpack.c.bf16 %v1122, %v1118
        %v1135 = vpack.c.bf16 %v1123, %v1119
        %v1136 = vpack.c.bf16 %v1124, %v1120
        %v1137 = vpack.c.bf16 %v1129, %v1125
        %v1138 = vpack.c.bf16 %v1130, %v1126
        %v1139 = vpack.c.bf16 %v1131, %v1127
        %v1140 = vpack.c.bf16 %v1132, %v1128
        %1141 = vmatprep.subr.bf16.mxu0 0
        %1142 = vmatpush1.bf16.msra.mxu0 0
        %1143 = vmatprep.subr.bf16.mxu0 0
        %1144 = vmatpush1.bf16.msra.mxu0 0
        %1145 = vmatprep.subr.bf16.mxu0 0
        %1146 = vmatpush1.bf16.msra.mxu0 0
        %1147 = vmatprep.subr.bf16.mxu0 0
        %1148 = vmatpush1.bf16.msra.mxu0 0
        %1149 = vmatprep.subr.bf16.mxu0 0
        %1150 = vmatpush1.bf16.msra.mxu0 0
        %1151 = vmatprep.subr.bf16.mxu0 0
        %1152 = vmatpush1.bf16.msra.mxu0 0
        %1153 = vmatprep.subr.bf16.mxu0 %v1138
        %1154 = vmatpush1.bf16.msra.mxu0 %v1137
        %1155 = vmatprep.subr.bf16.mxu0 %v1134
        %1156 = vmatpush1.bf16.msra.mxu0 %v1133
        %1157 = vmatprep.subr.bf16.mxu0 0
        %1158 = vmatpush2.bf16.msra.mxu0 0
        %1159 = vmatprep.subr.bf16.mxu0 0
        %1160 = vmatpush2.bf16.msra.mxu0 0
        %1161 = vmatprep.subr.bf16.mxu0 0
        %1162 = vmatpush2.bf16.msra.mxu0 0
        %1163 = vmatprep.subr.bf16.mxu0 0
        %1164 = vmatpush2.bf16.msra.mxu0 0
        %1165 = vmatprep.subr.bf16.mxu0 0
        %1166 = vmatpush2.bf16.msra.mxu0 0
        %1167 = vmatprep.subr.bf16.mxu0 0
        %1168 = vmatpush2.bf16.msra.mxu0 0
        %1169 = vmatprep.subr.bf16.mxu0 0
        %1170 = vmatpush2.bf16.msra.mxu0 0
        %1171 = vmatprep.subr.bf16.mxu0 0
        %1172 = vmatpush2.bf16.msra.mxu0 0
        %1173 = vmatprep.mubr.bf16.mxu0 0
        %1174 = vmatmul.mubr.bf16.gmra.mxu0 %v384
        %v1175 = vpop.f32.mrf.mxu0
        %v1176 = vadd.f32 %v370, %v1175
        %v1177 = vpop.f32.mrf.mxu0
        %v1178 = vadd.f32 %v370, %v1177
        %v1179 = vpop.f32.mrf.mxu0
        %v1180 = vadd.f32 %v375, %v1179
        %v1181 = vpop.f32.mrf.mxu0
        %v1182 = vadd.f32 %v375, %v1181
        %1183 = vdwg.mxu0
        %1184 = vmatprep.subr.bf16.mxu0 0
        %1185 = vmatpush1.bf16.msra.mxu0 0
        %1186 = vmatprep.subr.bf16.mxu0 0
        %1187 = vmatpush1.bf16.msra.mxu0 0
        %1188 = vmatprep.subr.bf16.mxu0 0
        %1189 = vmatpush1.bf16.msra.mxu0 0
        %1190 = vmatprep.subr.bf16.mxu0 0
        %1191 = vmatpush1.bf16.msra.mxu0 0
        %1192 = vmatprep.subr.bf16.mxu0 0
        %1193 = vmatpush1.bf16.msra.mxu0 0
        %1194 = vmatprep.subr.bf16.mxu0 0
        %1195 = vmatpush1.bf16.msra.mxu0 0
        %1196 = vmatprep.subr.bf16.mxu0 %v1140
        %1197 = vmatpush1.bf16.msra.mxu0 %v1139
        %1198 = vmatprep.subr.bf16.mxu0 %v1136
        %1199 = vmatpush1.bf16.msra.mxu0 %v1135
        %1200 = vmatprep.subr.bf16.mxu0 0
        %1201 = vmatpush2.bf16.msra.mxu0 0
        %1202 = vmatprep.subr.bf16.mxu0 0
        %1203 = vmatpush2.bf16.msra.mxu0 0
        %1204 = vmatprep.subr.bf16.mxu0 0
        %1205 = vmatpush2.bf16.msra.mxu0 0
        %1206 = vmatprep.subr.bf16.mxu0 0
        %1207 = vmatpush2.bf16.msra.mxu0 0
        %1208 = vmatprep.subr.bf16.mxu0 0
        %1209 = vmatpush2.bf16.msra.mxu0 0
        %1210 = vmatprep.subr.bf16.mxu0 0
        %1211 = vmatpush2.bf16.msra.mxu0 0
        %1212 = vmatprep.subr.bf16.mxu0 0
        %1213 = vmatpush2.bf16.msra.mxu0 0
        %1214 = vmatprep.subr.bf16.mxu0 0
        %1215 = vmatpush2.bf16.msra.mxu0 0
        %1216 = vmatprep.mubr.bf16.mxu0 0
        %1217 = vmatmul.mubr.bf16.gmra.mxu0 %v384
        %v1218 = vpop.f32.mrf.mxu0
        %v1219 = vadd.f32 %v370, %v1218
        %v1220 = vpop.f32.mrf.mxu0
        %v1221 = vadd.f32 %v370, %v1220
        %v1222 = vpop.f32.mrf.mxu0
        %v1223 = vadd.f32 %v375, %v1222
        %v1224 = vpop.f32.mrf.mxu0
        %v1225 = vadd.f32 %v375, %v1224
        %1226 = vdwg.mxu0
        %v1227 = vmax.f32 %v1176, 0.0
        %v1228 = vmax.f32 %v1178, 0.0
        %v1229 = vmax.f32 %v1219, 0.0
        %v1230 = vmax.f32 %v1221, 0.0
        %v1231 = vmax.f32 %v1180, 0.0
        %v1232 = vmax.f32 %v1182, 0.0
        %v1233 = vmax.f32 %v1223, 0.0
        %v1234 = vmax.f32 %v1225, 0.0
        %v1235 = vpack.c.bf16 %v1231, %v1227
        %v1236 = vpack.c.bf16 %v1232, %v1228
        %v1237 = vpack.c.bf16 %v1233, %v1229
        %v1238 = vpack.c.bf16 %v1234, %v1230
        %1239 = vmatprep.subr.bf16.mxu0 0
        %1240 = vmatpush1.bf16.msra.mxu0 0
        %1241 = vmatprep.subr.bf16.mxu0 0
        %1242 = vmatpush1.bf16.msra.mxu0 0
        %1243 = vmatprep.subr.bf16.mxu0 0
        %1244 = vmatpush1.bf16.msra.mxu0 0
        %1245 = vmatprep.subr.bf16.mxu0 0
        %1246 = vmatpush1.bf16.msra.mxu0 0
        %1247 = vmatprep.subr.bf16.mxu0 0
        %1248 = vmatpush1.bf16.msra.mxu0 0
        %1249 = vmatprep.subr.bf16.mxu0 0
        %1250 = vmatpush1.bf16.msra.mxu0 0
        %1251 = vmatprep.subr.bf16.mxu0 0
        %1252 = vmatpush1.bf16.msra.mxu0 0
        %1253 = vmatprep.subr.bf16.mxu0 %v1236
        %1254 = vmatpush1.bf16.msra.mxu0 %v1235
        %1255 = vmatprep.subr.bf16.mxu0 0
        %1256 = vmatpush2.bf16.msra.mxu0 0
        %1257 = vmatprep.subr.bf16.mxu0 0
        %1258 = vmatpush2.bf16.msra.mxu0 0
        %1259 = vmatprep.subr.bf16.mxu0 0
        %1260 = vmatpush2.bf16.msra.mxu0 0
        %1261 = vmatprep.subr.bf16.mxu0 0
        %1262 = vmatpush2.bf16.msra.mxu0 0
        %1263 = vmatprep.subr.bf16.mxu0 0
        %1264 = vmatpush2.bf16.msra.mxu0 0
        %1265 = vmatprep.subr.bf16.mxu0 0
        %1266 = vmatpush2.bf16.msra.mxu0 0
        %1267 = vmatprep.subr.bf16.mxu0 0
        %1268 = vmatpush2.bf16.msra.mxu0 0
        %1269 = vmatprep.subr.bf16.mxu0 0
        %1270 = vmatpush2.bf16.msra.mxu0 0
        %1271 = vmatprep.mubr.bf16.mxu0 0
        %1272 = vmatmul.mubr.bf16.gmra.mxu0 %v491
        %v1273 = vpop.f32.mrf.mxu0
        %v1274 = vadd.f32 %v487, %v1273
        %v1275 = vpop.f32.mrf.mxu0
        %v1276 = vadd.f32 %v487, %v1275
        %v1277 = vpop.f32.mrf.mxu0
        %v1278 = vpop.f32.mrf.mxu0
        %1279 = vdwg.mxu0
        %1280 = vmatprep.subr.bf16.mxu0 0
        %1281 = vmatpush1.bf16.msra.mxu0 0
        %1282 = vmatprep.subr.bf16.mxu0 0
        %1283 = vmatpush1.bf16.msra.mxu0 0
        %1284 = vmatprep.subr.bf16.mxu0 0
        %1285 = vmatpush1.bf16.msra.mxu0 0
        %1286 = vmatprep.subr.bf16.mxu0 0
        %1287 = vmatpush1.bf16.msra.mxu0 0
        %1288 = vmatprep.subr.bf16.mxu0 0
        %1289 = vmatpush1.bf16.msra.mxu0 0
        %1290 = vmatprep.subr.bf16.mxu0 0
        %1291 = vmatpush1.bf16.msra.mxu0 0
        %1292 = vmatprep.subr.bf16.mxu0 0
        %1293 = vmatpush1.bf16.msra.mxu0 0
        %1294 = vmatprep.subr.bf16.mxu0 %v1238
        %1295 = vmatpush1.bf16.msra.mxu0 %v1237
        %1296 = vmatprep.subr.bf16.mxu0 0
        %1297 = vmatpush2.bf16.msra.mxu0 0
        %1298 = vmatprep.subr.bf16.mxu0 0
        %1299 = vmatpush2.bf16.msra.mxu0 0
        %1300 = vmatprep.subr.bf16.mxu0 0
        %1301 = vmatpush2.bf16.msra.mxu0 0
        %1302 = vmatprep.subr.bf16.mxu0 0
        %1303 = vmatpush2.bf16.msra.mxu0 0
        %1304 = vmatprep.subr.bf16.mxu0 0
        %1305 = vmatpush2.bf16.msra.mxu0 0
        %1306 = vmatprep.subr.bf16.mxu0 0
        %1307 = vmatpush2.bf16.msra.mxu0 0
        %1308 = vmatprep.subr.bf16.mxu0 0
        %1309 = vmatpush2.bf16.msra.mxu0 0
        %1310 = vmatprep.subr.bf16.mxu0 0
        %1311 = vmatpush2.bf16.msra.mxu0 0
        %1312 = vmatprep.mubr.bf16.mxu0 0
        %1313 = vmatmul.mubr.bf16.gmra.mxu0 %v491
        %v1314 = vpop.f32.mrf.mxu0
        %v1315 = vadd.f32 %v487, %v1314
        %v1316 = vpop.f32.mrf.mxu0
        %v1317 = vadd.f32 %v487, %v1316
        %v1318 = vpop.f32.mrf.mxu0
        %v1319 = vpop.f32.mrf.mxu0
        %1320 = vdwg.mxu0
        %v1321 = vtanh.pop %v1274
        %v1322 = vtanh.pop %v1276
        %v1323 = vtanh.pop %v1315
        %v1324 = vtanh.pop %v1317
        %v1325 = vxor.u32 %v1321, 2147483648
        %v1326 = vxor.u32 %v1322, 2147483648
        %v1327 = vxor.u32 %v1323, 2147483648
        %v1328 = vxor.u32 %v1324, 2147483648
        %v1329 = vmul.f32 %v1325, 1.442695
        %v1330 = vpow.pop %v1329
        %v1331 = vmul.f32 %v1326, 1.442695
        %v1332 = vpow.pop %v1331
        %v1333 = vmul.f32 %v1327, 1.442695
        %v1334 = vpow.pop %v1333
        %v1335 = vmul.f32 %v1328, 1.442695
        %v1336 = vpow.pop %v1335
        %v1337 = vadd.f32 %v1330, 1.0
        %v1338 = vadd.f32 %v1332, 1.0
        %v1339 = vadd.f32 %v1334, 1.0
        %v1340 = vadd.f32 %v1336, 1.0
        %v1341 = vrcp.pop %v1337
        %v1342 = vmul.f32 1.0, %v1341
        %v1343 = vrcp.pop %v1338
        %v1344 = vmul.f32 1.0, %v1343
        %v1345 = vrcp.pop %v1339
        %v1346 = vmul.f32 1.0, %v1345
        %v1347 = vrcp.pop %v1340
        %v1348 = vmul.f32 1.0, %v1347
        %v1349 = vsel %vm581, %v1342, %v1321
        %v1350 = vsel %vm581, %v1344, %v1322
        %v1351 = vsel %vm581, %v1346, %v1323
        %v1352 = vsel %vm581, %v1348, %v1324
        %s1353 = scalar_lea.vmem %s182, 64
        %1354 = vst [vmem:[%s1353] sm:$0x1f] %v1349
        %1355 = vst [vmem:[%s1353 + $0x8] sm:$0x1f] %v1350
        %1356 = vst [vmem:[%s1353 + $0x10] sm:$0x1f] %v1351
        %1357 = vst [vmem:[%s1353 + $0x18] sm:$0x1f] %v1352
        %s1358 = scalar_lea.vmem %s150, 48 [#allocation2]
        %v1359 = vld [vmem:[%s1358] sm:$0xff]
        %v1360 = vld [vmem:[%s1358 + $0x8] sm:$0xff]
        %v1363 = vunpack.c.l.b16 %v1359
        %v1364 = vunpack.c.h.b16 %v1359
        %v1365 = vunpack.c.l.b16 %v1360
        %v1366 = vunpack.c.h.b16 %v1360
        %v1367 = vpack.c.b16 %v1363, %v1363
        %v1368 = vpack.c.b16 %v1364, %v1364
        %v1369 = vpack.c.b16 %v1365, %v1365
        %v1370 = vpack.c.b16 %v1366, %v1366
        %v1372 = vsel %vm224, %v1367, 0
        %v1375 = vsel %vm224, %v1368, 0
        %v1378 = vsel %vm224, %v1369, 0
        %v1381 = vsel %vm224, %v1370, 0
        %1383 = vmatprep.subr.bf16.mxu0 0
        %1384 = vmatpush1.bf16.msra.mxu0 0
        %1385 = vmatprep.subr.bf16.mxu0 0
        %1386 = vmatpush1.bf16.msra.mxu0 0
        %1387 = vmatprep.subr.bf16.mxu0 0
        %1388 = vmatpush1.bf16.msra.mxu0 0
        %1389 = vmatprep.subr.bf16.mxu0 0
        %1390 = vmatpush1.bf16.msra.mxu0 0
        %1391 = vmatprep.subr.bf16.mxu0 0
        %1392 = vmatpush1.bf16.msra.mxu0 0
        %1393 = vmatprep.subr.bf16.mxu0 0
        %1394 = vmatpush1.bf16.msra.mxu0 0
        %1395 = vmatprep.subr.bf16.mxu0 0
        %1396 = vmatpush1.bf16.msra.mxu0 0
        %1397 = vmatprep.subr.bf16.mxu0 %v1375
        %1398 = vmatpush1.bf16.msra.mxu0 %v1372
        %1399 = vmatprep.subr.bf16.mxu0 0
        %1400 = vmatpush2.bf16.msra.mxu0 0
        %1401 = vmatprep.subr.bf16.mxu0 0
        %1402 = vmatpush2.bf16.msra.mxu0 0
        %1403 = vmatprep.subr.bf16.mxu0 0
        %1404 = vmatpush2.bf16.msra.mxu0 0
        %1405 = vmatprep.subr.bf16.mxu0 0
        %1406 = vmatpush2.bf16.msra.mxu0 0
        %1407 = vmatprep.subr.bf16.mxu0 0
        %1408 = vmatpush2.bf16.msra.mxu0 0
        %1409 = vmatprep.subr.bf16.mxu0 0
        %1410 = vmatpush2.bf16.msra.mxu0 0
        %1411 = vmatprep.subr.bf16.mxu0 0
        %1412 = vmatpush2.bf16.msra.mxu0 0
        %1413 = vmatprep.subr.bf16.mxu0 0
        %1414 = vmatpush2.bf16.msra.mxu0 0
        %1415 = vmatprep.mubr.bf16.mxu0 0
        %1416 = vmatmul.mubr.bf16.gmra.mxu0 %v219
        %v1417 = vpop.f32.mrf.mxu0
        %v1418 = vadd.f32 0.0, %v1417
        %v1419 = vpop.f32.mrf.mxu0
        %v1420 = vadd.f32 0.0, %v1419
        %v1421 = vpop.f32.mrf.mxu0
        %v1422 = vadd.f32 0.0, %v1421
        %v1423 = vpop.f32.mrf.mxu0
        %v1424 = vadd.f32 0.0, %v1423
        %1425 = vmatprep.mubr.bf16.mxu0 0
        %1426 = vmatmul.mubr.bf16.gmra.mxu0 %v222
        %v1427 = vpop.f32.mrf.mxu0
        %v1428 = vadd.f32 0.0, %v1427
        %v1429 = vpop.f32.mrf.mxu0
        %v1430 = vadd.f32 0.0, %v1429
        %v1431 = vpop.f32.mrf.mxu0
        %v1432 = vadd.f32 0.0, %v1431
        %v1433 = vpop.f32.mrf.mxu0
        %v1434 = vadd.f32 0.0, %v1433
        %1435 = vdwg.mxu0
        %1436 = vmatprep.subr.bf16.mxu0 0
        %1437 = vmatpush1.bf16.msra.mxu0 0
        %1438 = vmatprep.subr.bf16.mxu0 0
        %1439 = vmatpush1.bf16.msra.mxu0 0
        %1440 = vmatprep.subr.bf16.mxu0 0
        %1441 = vmatpush1.bf16.msra.mxu0 0
        %1442 = vmatprep.subr.bf16.mxu0 0
        %1443 = vmatpush1.bf16.msra.mxu0 0
        %1444 = vmatprep.subr.bf16.mxu0 0
        %1445 = vmatpush1.bf16.msra.mxu0 0
        %1446 = vmatprep.subr.bf16.mxu0 0
        %1447 = vmatpush1.bf16.msra.mxu0 0
        %1448 = vmatprep.subr.bf16.mxu0 0
        %1449 = vmatpush1.bf16.msra.mxu0 0
        %1450 = vmatprep.subr.bf16.mxu0 %v1381
        %1451 = vmatpush1.bf16.msra.mxu0 %v1378
        %1452 = vmatprep.subr.bf16.mxu0 0
        %1453 = vmatpush2.bf16.msra.mxu0 0
        %1454 = vmatprep.subr.bf16.mxu0 0
        %1455 = vmatpush2.bf16.msra.mxu0 0
        %1456 = vmatprep.subr.bf16.mxu0 0
        %1457 = vmatpush2.bf16.msra.mxu0 0
        %1458 = vmatprep.subr.bf16.mxu0 0
        %1459 = vmatpush2.bf16.msra.mxu0 0
        %1460 = vmatprep.subr.bf16.mxu0 0
        %1461 = vmatpush2.bf16.msra.mxu0 0
        %1462 = vmatprep.subr.bf16.mxu0 0
        %1463 = vmatpush2.bf16.msra.mxu0 0
        %1464 = vmatprep.subr.bf16.mxu0 0
        %1465 = vmatpush2.bf16.msra.mxu0 0
        %1466 = vmatprep.subr.bf16.mxu0 0
        %1467 = vmatpush2.bf16.msra.mxu0 0
        %1468 = vmatprep.mubr.bf16.mxu0 0
        %1469 = vmatmul.mubr.bf16.gmra.mxu0 %v219
        %v1470 = vpop.f32.mrf.mxu0
        %v1471 = vadd.f32 0.0, %v1470
        %v1472 = vpop.f32.mrf.mxu0
        %v1473 = vadd.f32 0.0, %v1472
        %v1474 = vpop.f32.mrf.mxu0
        %v1475 = vadd.f32 0.0, %v1474
        %v1476 = vpop.f32.mrf.mxu0
        %v1477 = vadd.f32 0.0, %v1476
        %1478 = vmatprep.mubr.bf16.mxu0 0
        %1479 = vmatmul.mubr.bf16.gmra.mxu0 %v222
        %v1480 = vpop.f32.mrf.mxu0
        %v1481 = vadd.f32 0.0, %v1480
        %v1482 = vpop.f32.mrf.mxu0
        %v1483 = vadd.f32 0.0, %v1482
        %v1484 = vpop.f32.mrf.mxu0
        %v1485 = vadd.f32 0.0, %v1484
        %v1486 = vpop.f32.mrf.mxu0
        %v1487 = vadd.f32 0.0, %v1486
        %1488 = vdwg.mxu0
        %v1489 = vmax.f32 %v1418, 0.0
        %v1490 = vmax.f32 %v1420, 0.0
        %v1491 = vmax.f32 %v1471, 0.0
        %v1492 = vmax.f32 %v1473, 0.0
        %v1493 = vmax.f32 %v1422, 0.0
        %v1494 = vmax.f32 %v1424, 0.0
        %v1495 = vmax.f32 %v1475, 0.0
        %v1496 = vmax.f32 %v1477, 0.0
        %v1497 = vmax.f32 %v1428, 0.0
        %v1498 = vmax.f32 %v1430, 0.0
        %v1499 = vmax.f32 %v1481, 0.0
        %v1500 = vmax.f32 %v1483, 0.0
        %v1501 = vmax.f32 %v1432, 0.0
        %v1502 = vmax.f32 %v1434, 0.0
        %v1503 = vmax.f32 %v1485, 0.0
        %v1504 = vmax.f32 %v1487, 0.0
        %v1505 = vpack.c.bf16 %v1493, %v1489
        %v1506 = vpack.c.bf16 %v1494, %v1490
        %v1507 = vpack.c.bf16 %v1495, %v1491
        %v1508 = vpack.c.bf16 %v1496, %v1492
        %v1509 = vpack.c.bf16 %v1501, %v1497
        %v1510 = vpack.c.bf16 %v1502, %v1498
        %v1511 = vpack.c.bf16 %v1503, %v1499
        %v1512 = vpack.c.bf16 %v1504, %v1500
        %1513 = vmatprep.subr.bf16.mxu0 0
        %1514 = vmatpush1.bf16.msra.mxu0 0
        %1515 = vmatprep.subr.bf16.mxu0 0
        %1516 = vmatpush1.bf16.msra.mxu0 0
        %1517 = vmatprep.subr.bf16.mxu0 0
        %1518 = vmatpush1.bf16.msra.mxu0 0
        %1519 = vmatprep.subr.bf16.mxu0 0
        %1520 = vmatpush1.bf16.msra.mxu0 0
        %1521 = vmatprep.subr.bf16.mxu0 0
        %1522 = vmatpush1.bf16.msra.mxu0 0
        %1523 = vmatprep.subr.bf16.mxu0 0
        %1524 = vmatpush1.bf16.msra.mxu0 0
        %1525 = vmatprep.subr.bf16.mxu0 %v1510
        %1526 = vmatpush1.bf16.msra.mxu0 %v1509
        %1527 = vmatprep.subr.bf16.mxu0 %v1506
        %1528 = vmatpush1.bf16.msra.mxu0 %v1505
        %1529 = vmatprep.subr.bf16.mxu0 0
        %1530 = vmatpush2.bf16.msra.mxu0 0
        %1531 = vmatprep.subr.bf16.mxu0 0
        %1532 = vmatpush2.bf16.msra.mxu0 0
        %1533 = vmatprep.subr.bf16.mxu0 0
        %1534 = vmatpush2.bf16.msra.mxu0 0
        %1535 = vmatprep.subr.bf16.mxu0 0
        %1536 = vmatpush2.bf16.msra.mxu0 0
        %1537 = vmatprep.subr.bf16.mxu0 0
        %1538 = vmatpush2.bf16.msra.mxu0 0
        %1539 = vmatprep.subr.bf16.mxu0 0
        %1540 = vmatpush2.bf16.msra.mxu0 0
        %1541 = vmatprep.subr.bf16.mxu0 0
        %1542 = vmatpush2.bf16.msra.mxu0 0
        %1543 = vmatprep.subr.bf16.mxu0 0
        %1544 = vmatpush2.bf16.msra.mxu0 0
        %1545 = vmatprep.mubr.bf16.mxu0 0
        %1546 = vmatmul.mubr.bf16.gmra.mxu0 %v384
        %v1547 = vpop.f32.mrf.mxu0
        %v1548 = vadd.f32 %v370, %v1547
        %v1549 = vpop.f32.mrf.mxu0
        %v1550 = vadd.f32 %v370, %v1549
        %v1551 = vpop.f32.mrf.mxu0
        %v1552 = vadd.f32 %v375, %v1551
        %v1553 = vpop.f32.mrf.mxu0
        %v1554 = vadd.f32 %v375, %v1553
        %1555 = vdwg.mxu0
        %1556 = vmatprep.subr.bf16.mxu0 0
        %1557 = vmatpush1.bf16.msra.mxu0 0
        %1558 = vmatprep.subr.bf16.mxu0 0
        %1559 = vmatpush1.bf16.msra.mxu0 0
        %1560 = vmatprep.subr.bf16.mxu0 0
        %1561 = vmatpush1.bf16.msra.mxu0 0
        %1562 = vmatprep.subr.bf16.mxu0 0
        %1563 = vmatpush1.bf16.msra.mxu0 0
        %1564 = vmatprep.subr.bf16.mxu0 0
        %1565 = vmatpush1.bf16.msra.mxu0 0
        %1566 = vmatprep.subr.bf16.mxu0 0
        %1567 = vmatpush1.bf16.msra.mxu0 0
        %1568 = vmatprep.subr.bf16.mxu0 %v1512
        %1569 = vmatpush1.bf16.msra.mxu0 %v1511
        %1570 = vmatprep.subr.bf16.mxu0 %v1508
        %1571 = vmatpush1.bf16.msra.mxu0 %v1507
        %1572 = vmatprep.subr.bf16.mxu0 0
        %1573 = vmatpush2.bf16.msra.mxu0 0
        %1574 = vmatprep.subr.bf16.mxu0 0
        %1575 = vmatpush2.bf16.msra.mxu0 0
        %1576 = vmatprep.subr.bf16.mxu0 0
        %1577 = vmatpush2.bf16.msra.mxu0 0
        %1578 = vmatprep.subr.bf16.mxu0 0
        %1579 = vmatpush2.bf16.msra.mxu0 0
        %1580 = vmatprep.subr.bf16.mxu0 0
        %1581 = vmatpush2.bf16.msra.mxu0 0
        %1582 = vmatprep.subr.bf16.mxu0 0
        %1583 = vmatpush2.bf16.msra.mxu0 0
        %1584 = vmatprep.subr.bf16.mxu0 0
        %1585 = vmatpush2.bf16.msra.mxu0 0
        %1586 = vmatprep.subr.bf16.mxu0 0
        %1587 = vmatpush2.bf16.msra.mxu0 0
        %1588 = vmatprep.mubr.bf16.mxu0 0
        %1589 = vmatmul.mubr.bf16.gmra.mxu0 %v384
        %v1590 = vpop.f32.mrf.mxu0
        %v1591 = vadd.f32 %v370, %v1590
        %v1592 = vpop.f32.mrf.mxu0
        %v1593 = vadd.f32 %v370, %v1592
        %v1594 = vpop.f32.mrf.mxu0
        %v1595 = vadd.f32 %v375, %v1594
        %v1596 = vpop.f32.mrf.mxu0
        %v1597 = vadd.f32 %v375, %v1596
        %1598 = vdwg.mxu0
        %v1599 = vmax.f32 %v1548, 0.0
        %v1600 = vmax.f32 %v1550, 0.0
        %v1601 = vmax.f32 %v1591, 0.0
        %v1602 = vmax.f32 %v1593, 0.0
        %v1603 = vmax.f32 %v1552, 0.0
        %v1604 = vmax.f32 %v1554, 0.0
        %v1605 = vmax.f32 %v1595, 0.0
        %v1606 = vmax.f32 %v1597, 0.0
        %v1607 = vpack.c.bf16 %v1603, %v1599
        %v1608 = vpack.c.bf16 %v1604, %v1600
        %v1609 = vpack.c.bf16 %v1605, %v1601
        %v1610 = vpack.c.bf16 %v1606, %v1602
        %1611 = vmatprep.subr.bf16.mxu0 0
        %1612 = vmatpush1.bf16.msra.mxu0 0
        %1613 = vmatprep.subr.bf16.mxu0 0
        %1614 = vmatpush1.bf16.msra.mxu0 0
        %1615 = vmatprep.subr.bf16.mxu0 0
        %1616 = vmatpush1.bf16.msra.mxu0 0
        %1617 = vmatprep.subr.bf16.mxu0 0
        %1618 = vmatpush1.bf16.msra.mxu0 0
        %1619 = vmatprep.subr.bf16.mxu0 0
        %1620 = vmatpush1.bf16.msra.mxu0 0
        %1621 = vmatprep.subr.bf16.mxu0 0
        %1622 = vmatpush1.bf16.msra.mxu0 0
        %1623 = vmatprep.subr.bf16.mxu0 0
        %1624 = vmatpush1.bf16.msra.mxu0 0
        %1625 = vmatprep.subr.bf16.mxu0 %v1608
        %1626 = vmatpush1.bf16.msra.mxu0 %v1607
        %1627 = vmatprep.subr.bf16.mxu0 0
        %1628 = vmatpush2.bf16.msra.mxu0 0
        %1629 = vmatprep.subr.bf16.mxu0 0
        %1630 = vmatpush2.bf16.msra.mxu0 0
        %1631 = vmatprep.subr.bf16.mxu0 0
        %1632 = vmatpush2.bf16.msra.mxu0 0
        %1633 = vmatprep.subr.bf16.mxu0 0
        %1634 = vmatpush2.bf16.msra.mxu0 0
        %1635 = vmatprep.subr.bf16.mxu0 0
        %1636 = vmatpush2.bf16.msra.mxu0 0
        %1637 = vmatprep.subr.bf16.mxu0 0
        %1638 = vmatpush2.bf16.msra.mxu0 0
        %1639 = vmatprep.subr.bf16.mxu0 0
        %1640 = vmatpush2.bf16.msra.mxu0 0
        %1641 = vmatprep.subr.bf16.mxu0 0
        %1642 = vmatpush2.bf16.msra.mxu0 0
        %1643 = vmatprep.mubr.bf16.mxu0 0
        %1644 = vmatmul.mubr.bf16.gmra.mxu0 %v491
        %v1645 = vpop.f32.mrf.mxu0
        %v1646 = vadd.f32 %v487, %v1645
        %v1647 = vpop.f32.mrf.mxu0
        %v1648 = vadd.f32 %v487, %v1647
        %v1649 = vpop.f32.mrf.mxu0
        %v1650 = vpop.f32.mrf.mxu0
        %1651 = vdwg.mxu0
        %1652 = vmatprep.subr.bf16.mxu0 0
        %1653 = vmatpush1.bf16.msra.mxu0 0
        %1654 = vmatprep.subr.bf16.mxu0 0
        %1655 = vmatpush1.bf16.msra.mxu0 0
        %1656 = vmatprep.subr.bf16.mxu0 0
        %1657 = vmatpush1.bf16.msra.mxu0 0
        %1658 = vmatprep.subr.bf16.mxu0 0
        %1659 = vmatpush1.bf16.msra.mxu0 0
        %1660 = vmatprep.subr.bf16.mxu0 0
        %1661 = vmatpush1.bf16.msra.mxu0 0
        %1662 = vmatprep.subr.bf16.mxu0 0
        %1663 = vmatpush1.bf16.msra.mxu0 0
        %1664 = vmatprep.subr.bf16.mxu0 0
        %1665 = vmatpush1.bf16.msra.mxu0 0
        %1666 = vmatprep.subr.bf16.mxu0 %v1610
        %1667 = vmatpush1.bf16.msra.mxu0 %v1609
        %1668 = vmatprep.subr.bf16.mxu0 0
        %1669 = vmatpush2.bf16.msra.mxu0 0
        %1670 = vmatprep.subr.bf16.mxu0 0
        %1671 = vmatpush2.bf16.msra.mxu0 0
        %1672 = vmatprep.subr.bf16.mxu0 0
        %1673 = vmatpush2.bf16.msra.mxu0 0
        %1674 = vmatprep.subr.bf16.mxu0 0
        %1675 = vmatpush2.bf16.msra.mxu0 0
        %1676 = vmatprep.subr.bf16.mxu0 0
        %1677 = vmatpush2.bf16.msra.mxu0 0
        %1678 = vmatprep.subr.bf16.mxu0 0
        %1679 = vmatpush2.bf16.msra.mxu0 0
        %1680 = vmatprep.subr.bf16.mxu0 0
        %1681 = vmatpush2.bf16.msra.mxu0 0
        %1682 = vmatprep.subr.bf16.mxu0 0
        %1683 = vmatpush2.bf16.msra.mxu0 0
        %1684 = vmatprep.mubr.bf16.mxu0 0
        %1685 = vmatmul.mubr.bf16.gmra.mxu0 %v491
        %v1686 = vpop.f32.mrf.mxu0
        %v1687 = vadd.f32 %v487, %v1686
        %v1688 = vpop.f32.mrf.mxu0
        %v1689 = vadd.f32 %v487, %v1688
        %v1690 = vpop.f32.mrf.mxu0
        %v1691 = vpop.f32.mrf.mxu0
        %1692 = vdwg.mxu0
        %v1693 = vtanh.pop %v1646
        %v1694 = vtanh.pop %v1648
        %v1695 = vtanh.pop %v1687
        %v1696 = vtanh.pop %v1689
        %v1697 = vxor.u32 %v1693, 2147483648
        %v1698 = vxor.u32 %v1694, 2147483648
        %v1699 = vxor.u32 %v1695, 2147483648
        %v1700 = vxor.u32 %v1696, 2147483648
        %v1701 = vmul.f32 %v1697, 1.442695
        %v1702 = vpow.pop %v1701
        %v1703 = vmul.f32 %v1698, 1.442695
        %v1704 = vpow.pop %v1703
        %v1705 = vmul.f32 %v1699, 1.442695
        %v1706 = vpow.pop %v1705
        %v1707 = vmul.f32 %v1700, 1.442695
        %v1708 = vpow.pop %v1707
        %v1709 = vadd.f32 %v1702, 1.0
        %v1710 = vadd.f32 %v1704, 1.0
        %v1711 = vadd.f32 %v1706, 1.0
        %v1712 = vadd.f32 %v1708, 1.0
        %v1713 = vrcp.pop %v1709
        %v1714 = vmul.f32 1.0, %v1713
        %v1715 = vrcp.pop %v1710
        %v1716 = vmul.f32 1.0, %v1715
        %v1717 = vrcp.pop %v1711
        %v1718 = vmul.f32 1.0, %v1717
        %v1719 = vrcp.pop %v1712
        %v1720 = vmul.f32 1.0, %v1719
        %v1721 = vsel %vm581, %v1714, %v1693
        %v1722 = vsel %vm581, %v1716, %v1694
        %v1723 = vsel %vm581, %v1718, %v1695
        %v1724 = vsel %vm581, %v1720, %v1696
        %s1725 = scalar_lea.vmem %s182, 96
        %1726 = vst [vmem:[%s1725] sm:$0x1f] %v1721
        %1727 = vst [vmem:[%s1725 + $0x8] sm:$0x1f] %v1722
        %1728 = vst [vmem:[%s1725 + $0x10] sm:$0x1f] %v1723
        %1729 = vst [vmem:[%s1725 + $0x18] sm:$0x1f] %v1724
        %s1730 = smul.u32 4, %s17
        %p1731 = scmp.lt.s32.totalorder %s1730, 7
        %s1732 = scalar_select %p1731, %s1730, 7
        %s1733 = smul.addr %s1732, 4
        %s1734 = smul.addr %s1733, 8
        %s1735 = scalar_lea.vmem %s2, %s1734
        // Predicated region
        $region37: #{_predator_brain_padded.1} parent=27 // pred_check
          %p1736 = pneg %p82
        $region38: #{_predator_brain_padded.1} parent=27 // pred_check_branch
          %1738 = sbr.rel (%p1736) target = $region40
        $region39: #{_predator_brain_padded.1} parent=27 // pred_region
          %s1739 = smul.u32 4, %s17
        $region40: #{_predator_brain_padded.1} parent=27 // pred_fallthru
          _
      $region28: #{_predator_brain_padded.1} parent=5 // pred_fallthru
        _
      %p1740 = scmp.le.s32.totalorder 2, %s12
      // Predicated region
      $region41: #{_predator_brain_padded.1} parent=5 // pred_check
        %p1741 = pneg %p1740
      $region42: #{_predator_brain_padded.1} parent=5 // pred_check_branch
        %1743 = sbr.rel (%p1741) target = $region44
      $region43: #{_predator_brain_padded.1} parent=5 // pred_region
        %s1744 = ssub.s32 %s12, 2
        // Predicated region
        $region45: #{_predator_brain_padded.1} parent=43 // pred_check
          %p1745 = pneg %p88
        $region46: #{_predator_brain_padded.1} parent=43 // pred_check_branch
          %1747 = sbr.rel (%p1745) target = $region48
        $region47: #{_predator_brain_padded.1} parent=43 // pred_region
          %s1748 = smul.u32 4, %s18
          %p1749 = scmp.lt.s32.totalorder %s1748, 7
          %s1750 = scalar_select %p1749, %s1748, 7
          %s1751 = smul.addr %s1750, 4
          %s1752 = smul.addr %s1751, 8
          %s1753 = scalar_lea.vmem %s2, %s1752
        $region48: #{_predator_brain_padded.1} parent=43 // pred_fallthru
          _
      $region44: #{_predator_brain_padded.1} parent=5 // pred_fallthru
        _
    $region6: #{_predator_brain_padded.1} parent=1 // loop_footer
      %s16 = sadd.s32 1, %s12
    $region7: #{_predator_brain_padded.1} parent=1 // loop_footer_branch
      %11 = sbr.rel target = $region3
    $region8: #{_predator_brain_padded.1} parent=1 // loop_exit
      _
    %1754 = vsyncpa [#allocation3], 1
    %s1755 = scalar_lea.sflag [#allocation3], 1
    %1756 = vsyncpa %s1755, 1
    %1757 = vsyncpa [#allocation5], 1

</llo_original>
